<compile_context>
chip_gen: v6e
topology: v6e:2x2x1
jax: 0.10.0
libtpu: 0.0.40
codegen_flags: <defaults>
</compile_context>

<pallas_src>
import functools

import jax
import jax.numpy as jnp
import numpy as np
from jax.experimental import pallas as pl
from jax.experimental.pallas import tpu as pltpu


def _round_up(x, m):
    return ((x + m - 1) // m) * m


# ----------------------------- Pallas kernel --------------------------------
def _loc_attn_kernel(qcb_ref, vw_ref, cu_ref, wv_ref, spad_ref, keep_ref, memt_ref,
                     ctx_ref, prob_ref, next_ref, *, kp, pad):
    """One batch-block of location-sensitive attention.

    Layout: A (attention dim) on sublanes, time (Tp) on lanes everywhere, so all
    elementwise work (tanh / sigmoid / normalise) and both MXU outputs are lane-dense.
    """
    BB, Ck, Tp = memt_ref.shape
    A = vw_ref.shape[0]

    memt = memt_ref[...]                                            # [BB, Ck, Tp] f32
    sp = spad_ref[...]                                              # [BB, Tpp]    f32

    # key attention V(memory): batched MXU matmul computed in-kernel (no [B,T,A] in HBM).
    vwb = jnp.broadcast_to(vw_ref[...], (BB, A, Ck))                # bf16, tiny
    key = jnp.einsum('bac,bct->bat', vwb, memt.astype(jnp.bfloat16),
                     preferred_element_type=jnp.float32)            # [BB, A, Tp] f32

    # location attention: im2col of the zero-padded state built from static lane shifts,
    # then the folded Conv1d(1->F,K)*U projection as one batched MXU matmul.
    # TODO(synk): state is an accumulated attention history; for very long decoders keep
    # this contraction in f32 instead of bf16 to avoid mantissa loss late in decoding.
    ic = jnp.stack([sp[:, k:k + Tp] for k in range(kp)], axis=1)    # [BB, Kp, Tp]
    cub = jnp.broadcast_to(cu_ref[...], (BB, A, kp))                # bf16, tiny
    loc = jnp.einsum('bak,bkt->bat', cub, ic.astype(jnp.bfloat16),
                     preferred_element_type=jnp.float32)            # [BB, A, Tp] f32

    # energies: w . tanh(key_att + loc_att + (query_att + conv_bias*U)); the energy
    # projection is a broadcast-mul + sublane reduce over A.
    h = jnp.tanh(key + loc + qcb_ref[...][:, :, None])              # [BB, A, Tp] f32
    e = jnp.sum(h * wv_ref[...][None, :, :], axis=1)                # [BB, Tp]

    # masked_fill(mask, -inf) then sigmoid  ==  sigmoid * keep-mask (keep==0 where masked;
    # time-padding lanes have keep==0 so they drop out of the normalisation).
    sig = jax.nn.sigmoid(e) * keep_ref[...]                         # [BB, Tp]
    denom = jnp.sum(sig, axis=-1, keepdims=True)                    # [BB, 1]
    prob = sig * pl.reciprocal(denom)                               # smoothing normalisation

    prob_ref[...] = prob                                            # lane-dense store
    next_ref[...] = prob + sp[:, pad:pad + Tp]                      # accumulate=True
    # context[b, c] = sum_t prob[b, t] * memory[b, c, t]  (memory is time-major on lanes).
    # TODO(synk): for real encoder widths (Ck >= 128) switch to an MXU dot and a
    # lane-dense ctx out_spec instead of this broadcast-mul + lane reduce.
    ctx_ref[...] = jnp.sum(memt * prob[:, None, :], axis=-1)        # [BB, Ck]


# ------------------------------ wrapper --------------------------------------
def location_attention_forward(memory_tbc, query_1bc, state_b1t, mask_bt, params,
                               block_b=32):
    """Full forward pass (init_state + forward) of LocationAttention.

    memory_tbc : [T, B, Ck]   query_1bc : [1, B, Cq]
    state_b1t  : [B, 1, T]    mask_bt   : [B, T] bool (True == masked)
    returns (context [1,B,Ck], probability [B,1,T], next_state [B,1,T])
    """
    T, B, Ck = memory_tbc.shape
    A = params["V_w"].shape[0]
    _, _, K = params["conv_w"].shape
    pad = K // 2   # TODO(synk): matches PyTorch 'same' Conv1d output length only for odd K.
    f32 = jnp.float32

    Tp = _round_up(T, 128)                 # lane-dense time axis
    Tpp = _round_up(Tp + 2 * pad, 128)     # padded-state lane axis (>= Tp + K - 1)
    Kp = _round_up(K, 8)                   # sublane-aligned conv contraction dim

    # Batch blocking: sublane-aligned, no all-padding grid steps (a padding-only second
    # grid step is pure serial waste on single-TC v5e/v6e).
    # TODO(synk): on v7x (2 TCs) split real rows across 2 blocks when G == 1 and B > 8.
    block_b = max(8, min(_round_up(block_b, 8), _round_up(B, 8)))
    G = pl.cdiv(B, block_b)
    Bp = G * block_b

    memory = jnp.transpose(memory_tbc, (1, 0, 2)).astype(f32)       # [B, T, Ck]
    query = query_1bc[0].astype(f32)                                # [B, Cq]
    state = state_b1t[:, 0, :].astype(f32)                          # [B, T]

    # Hoisted tiny per-row projections: W(q)+b plus the conv-bias term folded through U.
    q_att = query @ params["W_w"].T + params["W_b"]                 # [B, A]
    cbU = params["conv_b"] @ params["U_w"].T                        # [A]
    qcb = q_att + cbU[None, :]                                      # [B, A]

    # Conv1d(1->F, K) folded with U into a single [A, K] projection of the state im2col:
    # CU_T[a, k] = sum_f U_w[a, f] * conv_w[f, 0, k]
    CU_T = params["U_w"] @ params["conv_w"][:, 0, :]                # [A, K]

    def pad_to(x, shape):
        return jnp.pad(x, [(0, s - d) for d, s in zip(x.shape, shape)])

    qcb_p = pad_to(qcb, (Bp, A))
    vw_p = params["V_w"].astype(jnp.bfloat16)                       # [A, Ck]
    cu_p = pad_to(CU_T, (A, Kp)).astype(jnp.bfloat16)               # [A, Kp]
    wv_p = params["w_w"].reshape(A, 1).astype(f32)                  # [A, 1]
    # zero-padded attention state: spad[b, pad + t] = state[b, t]
    spad_p = jnp.zeros((Bp, Tpp), f32).at[:B, pad:pad + T].set(state)
    memt_p = jnp.transpose(pad_to(memory, (Bp, Tp, Ck)), (0, 2, 1))  # [Bp, Ck, Tp]

    # keep-mask: 1.0 == kept.  Time-pad lanes dropped; padded batch rows kept for t < T
    # so their (discarded) rows normalise to finite values.
    keep_p = jnp.zeros((Bp, Tp), f32).at[:, :T].set(1.0)
    keep_p = keep_p.at[:B, :T].set(1.0 - mask_bt.astype(f32))

    out_shapes = (
        jax.ShapeDtypeStruct((Bp, Ck), f32),     # context
        jax.ShapeDtypeStruct((Bp, Tp), f32),     # probability
        jax.ShapeDtypeStruct((Bp, Tp), f32),     # next_state
    )
    in_specs = [
        pl.BlockSpec((block_b, A), lambda g: (g, 0)),            # query_att + conv_bias*U
        pl.BlockSpec((A, Ck), lambda g: (0, 0)),                 # V weight (bf16)
        pl.BlockSpec((A, Kp), lambda g: (0, 0)),                 # folded conv*U weight (bf16)
        pl.BlockSpec((A, 1), lambda g: (0, 0)),                  # energy projection w
        pl.BlockSpec((block_b, Tpp), lambda g: (g, 0)),          # zero-padded state
        pl.BlockSpec((block_b, Tp), lambda g: (g, 0)),           # keep mask
        pl.BlockSpec((block_b, Ck, Tp), lambda g: (g, 0, 0)),    # memory, time on lanes
    ]
    out_specs = (
        pl.BlockSpec((block_b, Ck), lambda g: (g, 0)),
        pl.BlockSpec((block_b, Tp), lambda g: (g, 0)),
        pl.BlockSpec((block_b, Tp), lambda g: (g, 0)),
    )

    kernel = functools.partial(_loc_attn_kernel, kp=Kp, pad=pad)
    ctx, prob, nxt = pl.pallas_call(
        kernel,
        out_shape=out_shapes,
        grid=(G,),
        in_specs=in_specs,
        out_specs=out_specs,
        compiler_params=pltpu.CompilerParams(
            dimension_semantics=("parallel",)),
    )(qcb_p, vw_p, cu_p, wv_p, spad_p, keep_p, memt_p)

    context_tbc = ctx[:B][None, :, :]                                # [1, B, Ck]
    probability = prob[:B, :T][:, None, :]                           # [B, 1, T]
    next_state = nxt[:B, :T][:, None, :]                             # [B, 1, T]
    return context_tbc, probability, next_state


# ------------------------------ reference ------------------------------------
def reference_forward(memory_tbc, query_1bc, state_b1t, mask_bt, params):
    """Pure-JAX reference mirroring the PyTorch forward (smoothing=True, accumulate=True)."""
    memory = jnp.transpose(memory_tbc, (1, 0, 2))                     # [B,T,Ck]
    key_att = memory @ params["V_w"].T                                # [B,T,A]
    q = query_1bc[0]                                                  # [B,Cq]
    q_att = q @ params["W_w"].T + params["W_b"]                       # [B,A]
    K = params["conv_w"].shape[2]
    loc = jax.lax.conv_general_dilated(
        state_b1t, params["conv_w"], window_strides=(1,),
        padding=[(K // 2, K // 2)],
        dimension_numbers=("NCH", "OIH", "NCH"))                      # [B,F,T]
    loc = loc + params["conv_b"][None, :, None]
    loc_att = jnp.transpose(loc, (0, 2, 1)) @ params["U_w"].T         # [B,T,A]
    h = jnp.tanh(key_att + loc_att + q_att[:, None, :])
    e = (h @ params["w_w"].T)[..., 0]                                 # [B,T]
    e = jnp.where(mask_bt, -jnp.inf, e)
    sig = jax.nn.sigmoid(e)
    prob = sig / jnp.sum(sig, axis=1, keepdims=True)                  # [B,T]
    next_state = prob[:, None, :] + state_b1t
    context = jnp.einsum("bt,btc->bc", prob, memory)
    return context[None, :, :], prob[:, None, :], next_state


# ------------------------------- main -----------------------------------------
if __name__ == "__main__":
    B, T = 2, 16
    dim_key, dim_query, dim_attention = 8, 16, 32
    num_location_features, K = 8, 31

    key = jax.random.PRNGKey(0)
    ks = jax.random.split(key, 12)

    params = {
        "W_w": jax.random.normal(ks[0], (dim_attention, dim_query), jnp.float32) / np.sqrt(dim_query),
        "W_b": jax.random.normal(ks[1], (dim_attention,), jnp.float32) * 0.1,
        "V_w": jax.random.normal(ks[2], (dim_attention, dim_key), jnp.float32) / np.sqrt(dim_key),
        "U_w": jax.random.normal(ks[3], (dim_attention, num_location_features), jnp.float32)
               / np.sqrt(num_location_features),
        "conv_w": jax.random.normal(ks[4], (num_location_features, 1, K), jnp.float32) / np.sqrt(K),
        "conv_b": jax.random.normal(ks[5], (num_location_features,), jnp.float32) * 0.1,
        "w_w": jax.random.normal(ks[6], (1, dim_attention), jnp.float32) / np.sqrt(dim_attention),
    }

    memory_tbc = jax.random.normal(ks[7], (T, B, dim_key), jnp.float32)       # encoder outputs
    query_1bc = jax.random.normal(ks[8], (1, B, dim_query), jnp.float32)      # decoder input
    state_raw = jax.nn.softmax(jax.random.normal(ks[9], (B, 1, T), jnp.float32), axis=-1)
    mask_bt = jnp.zeros((B, T), bool).at[0, 13:].set(True)                    # pad mask (True == masked)

    ctx, prob, nxt = location_attention_forward(memory_tbc, query_1bc, state_raw, mask_bt, params)
    jax.block_until_ready((ctx, prob, nxt))

    ctx_r, prob_r, nxt_r = reference_forward(memory_tbc, query_1bc, state_raw, mask_bt, params)

    assert ctx.shape == (1, B, dim_key) and prob.shape == (B, 1, T) and nxt.shape == (B, 1, T)
    np.testing.assert_allclose(np.asarray(prob), np.asarray(prob_r), rtol=1e-2, atol=1e-2)
    np.testing.assert_allclose(np.asarray(nxt), np.asarray(nxt_r), rtol=1e-2, atol=1e-2)
    np.testing.assert_allclose(np.asarray(ctx), np.asarray(ctx_r), rtol=1e-2, atol=1e-2)

    print("KERNEL_OK")
</pallas_src>

<mosaic_0001>
module attributes {stable_mosaic.version = 11 : i64} {
  func.func @_loc_attn_kernel(%arg0: i32, %arg1: memref<8x32xf32, #tpu.memory_space<vmem>>, %arg2: memref<32x8xbf16, #tpu.memory_space<vmem>>, %arg3: memref<32x32xbf16, #tpu.memory_space<vmem>>, %arg4: memref<32x1xf32, #tpu.memory_space<vmem>>, %arg5: memref<8x256xf32, #tpu.memory_space<vmem>>, %arg6: memref<8x128xf32, #tpu.memory_space<vmem>>, %arg7: memref<8x8x128xf32, #tpu.memory_space<vmem>>, %arg8: memref<8x8xf32, #tpu.memory_space<vmem>>, %arg9: memref<8x128xf32, #tpu.memory_space<vmem>>, %arg10: memref<8x128xf32, #tpu.memory_space<vmem>>) attributes {dimension_semantics = [#tpu.dimension_semantics<parallel>], iteration_bounds = array<i64: 1>, scalar_prefetch = 0 : i64, scratch_operands = 0 : i64, tpu.core_type = #tpu.core_type<tc>, window_params = [{transform_indices = @transform_0, window_bounds = array<i64: 8, 32>}, {pipeline_mode = #tpu.pipeline_mode<synchronous>, transform_indices = @transform_1, window_bounds = array<i64: 32, 8>}, {pipeline_mode = #tpu.pipeline_mode<synchronous>, transform_indices = @transform_2, window_bounds = array<i64: 32, 32>}, {pipeline_mode = #tpu.pipeline_mode<synchronous>, transform_indices = @transform_3, window_bounds = array<i64: 32, 1>}, {transform_indices = @transform_4, window_bounds = array<i64: 8, 256>}, {transform_indices = @transform_5, window_bounds = array<i64: 8, 128>}, {transform_indices = @transform_6, window_bounds = array<i64: 8, 8, 128>}, {transform_indices = @transform_7, window_bounds = array<i64: 8, 8>}, {transform_indices = @transform_8, window_bounds = array<i64: 8, 128>}, {transform_indices = @transform_9, window_bounds = array<i64: 8, 128>}]} {
    %c0 = arith.constant 0 : index
    %c0_0 = arith.constant 0 : index
    %c0_1 = arith.constant 0 : index
    %0 = vector.load %arg7[%c0, %c0_0, %c0_1] : memref<8x8x128xf32, #tpu.memory_space<vmem>>, vector<8x8x128xf32>
    %c0_2 = arith.constant 0 : index
    %c0_3 = arith.constant 0 : index
    %1 = vector.load %arg5[%c0_2, %c0_3] : memref<8x256xf32, #tpu.memory_space<vmem>>, vector<8x256xf32>
    %c0_4 = arith.constant 0 : index
    %c0_5 = arith.constant 0 : index
    %2 = vector.load %arg2[%c0_4, %c0_5] : memref<32x8xbf16, #tpu.memory_space<vmem>>, vector<32x8xbf16>
    %3 = vector.shape_cast %2 : vector<32x8xbf16> to vector<1x32x8xbf16>
    %4 = vector.broadcast %3 : vector<1x32x8xbf16> to vector<8x32x8xbf16>
    %5 = arith.truncf %0 : vector<8x8x128xf32> to vector<8x8x128xbf16>
    "tpu.trace_start"() <{level = 10 : i32, message = "bac,bct->bat"}> : () -> ()
    %cst = arith.constant dense<0.000000e+00> : vector<8x32x128xf32>
    %6 = tpu.matmul %4, %5, %cst {dimension_numbers = #tpu.dot_dimension_numbers<[2], [1], [1], [2], [0, 0, 0, 1, 1, 2], [0], [0]>} : vector<8x32x8xbf16>, vector<8x8x128xbf16>, vector<8x32x128xf32> -> vector<8x32x128xf32>
    "tpu.trace_stop"() : () -> ()
    %7 = vector.extract_strided_slice %1 {offsets = [0, 0], sizes = [8, 128], strides = [1, 1]} : vector<8x256xf32> to vector<8x128xf32>
    %8 = vector.extract_strided_slice %1 {offsets = [0, 1], sizes = [8, 128], strides = [1, 1]} : vector<8x256xf32> to vector<8x128xf32>
    %9 = vector.extract_strided_slice %1 {offsets = [0, 2], sizes = [8, 128], strides = [1, 1]} : vector<8x256xf32> to vector<8x128xf32>
    %10 = vector.extract_strided_slice %1 {offsets = [0, 3], sizes = [8, 128], strides = [1, 1]} : vector<8x256xf32> to vector<8x128xf32>
    %11 = vector.extract_strided_slice %1 {offsets = [0, 4], sizes = [8, 128], strides = [1, 1]} : vector<8x256xf32> to vector<8x128xf32>
    %12 = vector.extract_strided_slice %1 {offsets = [0, 5], sizes = [8, 128], strides = [1, 1]} : vector<8x256xf32> to vector<8x128xf32>
    %13 = vector.extract_strided_slice %1 {offsets = [0, 6], sizes = [8, 128], strides = [1, 1]} : vector<8x256xf32> to vector<8x128xf32>
    %14 = vector.extract_strided_slice %1 {offsets = [0, 7], sizes = [8, 128], strides = [1, 1]} : vector<8x256xf32> to vector<8x128xf32>
    %15 = vector.extract_strided_slice %1 {offsets = [0, 8], sizes = [8, 128], strides = [1, 1]} : vector<8x256xf32> to vector<8x128xf32>
    %16 = vector.extract_strided_slice %1 {offsets = [0, 9], sizes = [8, 128], strides = [1, 1]} : vector<8x256xf32> to vector<8x128xf32>
    %17 = vector.extract_strided_slice %1 {offsets = [0, 10], sizes = [8, 128], strides = [1, 1]} : vector<8x256xf32> to vector<8x128xf32>
    %18 = vector.extract_strided_slice %1 {offsets = [0, 11], sizes = [8, 128], strides = [1, 1]} : vector<8x256xf32> to vector<8x128xf32>
    %19 = vector.extract_strided_slice %1 {offsets = [0, 12], sizes = [8, 128], strides = [1, 1]} : vector<8x256xf32> to vector<8x128xf32>
    %20 = vector.extract_strided_slice %1 {offsets = [0, 13], sizes = [8, 128], strides = [1, 1]} : vector<8x256xf32> to vector<8x128xf32>
    %21 = vector.extract_strided_slice %1 {offsets = [0, 14], sizes = [8, 128], strides = [1, 1]} : vector<8x256xf32> to vector<8x128xf32>
    %22 = vector.extract_strided_slice %1 {offsets = [0, 15], sizes = [8, 128], strides = [1, 1]} : vector<8x256xf32> to vector<8x128xf32>
    %23 = vector.extract_strided_slice %1 {offsets = [0, 16], sizes = [8, 128], strides = [1, 1]} : vector<8x256xf32> to vector<8x128xf32>
    %24 = vector.extract_strided_slice %1 {offsets = [0, 17], sizes = [8, 128], strides = [1, 1]} : vector<8x256xf32> to vector<8x128xf32>
    %25 = vector.extract_strided_slice %1 {offsets = [0, 18], sizes = [8, 128], strides = [1, 1]} : vector<8x256xf32> to vector<8x128xf32>
    %26 = vector.extract_strided_slice %1 {offsets = [0, 19], sizes = [8, 128], strides = [1, 1]} : vector<8x256xf32> to vector<8x128xf32>
    %27 = vector.extract_strided_slice %1 {offsets = [0, 20], sizes = [8, 128], strides = [1, 1]} : vector<8x256xf32> to vector<8x128xf32>
    %28 = vector.extract_strided_slice %1 {offsets = [0, 21], sizes = [8, 128], strides = [1, 1]} : vector<8x256xf32> to vector<8x128xf32>
    %29 = vector.extract_strided_slice %1 {offsets = [0, 22], sizes = [8, 128], strides = [1, 1]} : vector<8x256xf32> to vector<8x128xf32>
    %30 = vector.extract_strided_slice %1 {offsets = [0, 23], sizes = [8, 128], strides = [1, 1]} : vector<8x256xf32> to vector<8x128xf32>
    %31 = vector.extract_strided_slice %1 {offsets = [0, 24], sizes = [8, 128], strides = [1, 1]} : vector<8x256xf32> to vector<8x128xf32>
    %32 = vector.extract_strided_slice %1 {offsets = [0, 25], sizes = [8, 128], strides = [1, 1]} : vector<8x256xf32> to vector<8x128xf32>
    %33 = vector.extract_strided_slice %1 {offsets = [0, 26], sizes = [8, 128], strides = [1, 1]} : vector<8x256xf32> to vector<8x128xf32>
    %34 = vector.extract_strided_slice %1 {offsets = [0, 27], sizes = [8, 128], strides = [1, 1]} : vector<8x256xf32> to vector<8x128xf32>
    %35 = vector.extract_strided_slice %1 {offsets = [0, 28], sizes = [8, 128], strides = [1, 1]} : vector<8x256xf32> to vector<8x128xf32>
    %36 = vector.extract_strided_slice %1 {offsets = [0, 29], sizes = [8, 128], strides = [1, 1]} : vector<8x256xf32> to vector<8x128xf32>
    %37 = vector.extract_strided_slice %1 {offsets = [0, 30], sizes = [8, 128], strides = [1, 1]} : vector<8x256xf32> to vector<8x128xf32>
    %38 = vector.extract_strided_slice %1 {offsets = [0, 31], sizes = [8, 128], strides = [1, 1]} : vector<8x256xf32> to vector<8x128xf32>
    %39 = vector.shape_cast %7 : vector<8x128xf32> to vector<8x1x128xf32>
    %40 = vector.shape_cast %8 : vector<8x128xf32> to vector<8x1x128xf32>
    %41 = vector.shape_cast %9 : vector<8x128xf32> to vector<8x1x128xf32>
    %42 = vector.shape_cast %10 : vector<8x128xf32> to vector<8x1x128xf32>
    %43 = vector.shape_cast %11 : vector<8x128xf32> to vector<8x1x128xf32>
    %44 = vector.shape_cast %12 : vector<8x128xf32> to vector<8x1x128xf32>
    %45 = vector.shape_cast %13 : vector<8x128xf32> to vector<8x1x128xf32>
    %46 = vector.shape_cast %14 : vector<8x128xf32> to vector<8x1x128xf32>
    %47 = vector.shape_cast %15 : vector<8x128xf32> to vector<8x1x128xf32>
    %48 = vector.shape_cast %16 : vector<8x128xf32> to vector<8x1x128xf32>
    %49 = vector.shape_cast %17 : vector<8x128xf32> to vector<8x1x128xf32>
    %50 = vector.shape_cast %18 : vector<8x128xf32> to vector<8x1x128xf32>
    %51 = vector.shape_cast %19 : vector<8x128xf32> to vector<8x1x128xf32>
    %52 = vector.shape_cast %20 : vector<8x128xf32> to vector<8x1x128xf32>
    %53 = vector.shape_cast %21 : vector<8x128xf32> to vector<8x1x128xf32>
    %54 = vector.shape_cast %22 : vector<8x128xf32> to vector<8x1x128xf32>
    %55 = vector.shape_cast %23 : vector<8x128xf32> to vector<8x1x128xf32>
    %56 = vector.shape_cast %24 : vector<8x128xf32> to vector<8x1x128xf32>
    %57 = vector.shape_cast %25 : vector<8x128xf32> to vector<8x1x128xf32>
    %58 = vector.shape_cast %26 : vector<8x128xf32> to vector<8x1x128xf32>
    %59 = vector.shape_cast %27 : vector<8x128xf32> to vector<8x1x128xf32>
    %60 = vector.shape_cast %28 : vector<8x128xf32> to vector<8x1x128xf32>
    %61 = vector.shape_cast %29 : vector<8x128xf32> to vector<8x1x128xf32>
    %62 = vector.shape_cast %30 : vector<8x128xf32> to vector<8x1x128xf32>
    %63 = vector.shape_cast %31 : vector<8x128xf32> to vector<8x1x128xf32>
    %64 = vector.shape_cast %32 : vector<8x128xf32> to vector<8x1x128xf32>
    %65 = vector.shape_cast %33 : vector<8x128xf32> to vector<8x1x128xf32>
    %66 = vector.shape_cast %34 : vector<8x128xf32> to vector<8x1x128xf32>
    %67 = vector.shape_cast %35 : vector<8x128xf32> to vector<8x1x128xf32>
    %68 = vector.shape_cast %36 : vector<8x128xf32> to vector<8x1x128xf32>
    %69 = vector.shape_cast %37 : vector<8x128xf32> to vector<8x1x128xf32>
    %70 = vector.shape_cast %38 : vector<8x128xf32> to vector<8x1x128xf32>
    %71 = tpu.concatenate %39, %40, %41, %42, %43, %44, %45, %46, %47, %48, %49, %50, %51, %52, %53, %54 in 1 : vector<8x1x128xf32>, vector<8x1x128xf32>, vector<8x1x128xf32>, vector<8x1x128xf32>, vector<8x1x128xf32>, vector<8x1x128xf32>, vector<8x1x128xf32>, vector<8x1x128xf32>, vector<8x1x128xf32>, vector<8x1x128xf32>, vector<8x1x128xf32>, vector<8x1x128xf32>, vector<8x1x128xf32>, vector<8x1x128xf32>, vector<8x1x128xf32>, vector<8x1x128xf32> -> vector<8x16x128xf32>
    %72 = tpu.concatenate %55, %56, %57, %58, %59, %60, %61, %62, %63, %64, %65, %66, %67, %68, %69, %70 in 1 : vector<8x1x128xf32>, vector<8x1x128xf32>, vector<8x1x128xf32>, vector<8x1x128xf32>, vector<8x1x128xf32>, vector<8x1x128xf32>, vector<8x1x128xf32>, vector<8x1x128xf32>, vector<8x1x128xf32>, vector<8x1x128xf32>, vector<8x1x128xf32>, vector<8x1x128xf32>, vector<8x1x128xf32>, vector<8x1x128xf32>, vector<8x1x128xf32>, vector<8x1x128xf32> -> vector<8x16x128xf32>
    %73 = tpu.concatenate %71, %72 in 1 : vector<8x16x128xf32>, vector<8x16x128xf32> -> vector<8x32x128xf32>
    %c0_6 = arith.constant 0 : index
    %c0_7 = arith.constant 0 : index
    %74 = vector.load %arg3[%c0_6, %c0_7] : memref<32x32xbf16, #tpu.memory_space<vmem>>, vector<32x32xbf16>
    %75 = vector.shape_cast %74 : vector<32x32xbf16> to vector<1x32x32xbf16>
    %76 = vector.broadcast %75 : vector<1x32x32xbf16> to vector<8x32x32xbf16>
    %77 = arith.truncf %73 : vector<8x32x128xf32> to vector<8x32x128xbf16>
    "tpu.trace_start"() <{level = 10 : i32, message = "bak,bkt->bat"}> : () -> ()
    %cst_8 = arith.constant dense<0.000000e+00> : vector<8x32x128xf32>
    %78 = tpu.matmul %76, %77, %cst_8 {dimension_numbers = #tpu.dot_dimension_numbers<[2], [1], [1], [2], [0, 0, 0, 1, 1, 2], [0], [0]>} : vector<8x32x32xbf16>, vector<8x32x128xbf16>, vector<8x32x128xf32> -> vector<8x32x128xf32>
    "tpu.trace_stop"() : () -> ()
    %79 = arith.addf %6, %78 : vector<8x32x128xf32>
    %c0_9 = arith.constant 0 : index
    %c0_10 = arith.constant 0 : index
    %80 = vector.load %arg1[%c0_9, %c0_10] : memref<8x32xf32, #tpu.memory_space<vmem>>, vector<8x32xf32>
    %81 = vector.shape_cast %80 : vector<8x32xf32> to vector<8x32x1xf32>
    %82 = vector.broadcast %81 : vector<8x32x1xf32> to vector<8x32x128xf32>
    %83 = arith.addf %79, %82 : vector<8x32x128xf32>
    %84 = math.tanh %83 : vector<8x32x128xf32>
    %c0_11 = arith.constant 0 : index
    %c0_12 = arith.constant 0 : index
    %85 = vector.load %arg4[%c0_11, %c0_12] : memref<32x1xf32, #tpu.memory_space<vmem>>, vector<32x1xf32>
    %86 = vector.shape_cast %85 : vector<32x1xf32> to vector<1x32x1xf32>
    %87 = vector.broadcast %86 : vector<1x32x1xf32> to vector<8x32x128xf32>
    %88 = arith.mulf %84, %87 : vector<8x32x128xf32>
    %cst_13 = arith.constant dense<0.000000e+00> : vector<8x128xf32>
    %89 = vector.multi_reduction <add>, %88, %cst_13 [1] : vector<8x32x128xf32> to vector<8x128xf32>
    %90 = arith.negf %89 : vector<8x128xf32>
    %91 = math.exp %90 : vector<8x128xf32>
    %cst_14 = arith.constant 1.000000e+00 : f32
    %92 = vector.broadcast %cst_14 : f32 to vector<8x128xf32>
    %93 = arith.addf %92, %91 : vector<8x128xf32>
    %94 = arith.divf %92, %93 : vector<8x128xf32>
    %c0_15 = arith.constant 0 : index
    %c0_16 = arith.constant 0 : index
    %95 = vector.load %arg6[%c0_15, %c0_16] : memref<8x128xf32, #tpu.memory_space<vmem>>, vector<8x128xf32>
    %96 = arith.mulf %94, %95 : vector<8x128xf32>
    %cst_17 = arith.constant dense<0.000000e+00> : vector<8xf32>
    %97 = vector.multi_reduction <add>, %96, %cst_17 [1] : vector<8x128xf32> to vector<8xf32>
    %98 = vector.shape_cast %97 : vector<8xf32> to vector<8x1xf32>
    %99 = tpu.reciprocal %98 : vector<8x1xf32> -> vector<8x1xf32>
    %100 = vector.broadcast %99 : vector<8x1xf32> to vector<8x128xf32>
    %101 = arith.mulf %96, %100 : vector<8x128xf32>
    %c0_18 = arith.constant 0 : index
    %c0_19 = arith.constant 0 : index
    %102 = vector.load %arg9[%c0_18, %c0_19] : memref<8x128xf32, #tpu.memory_space<vmem>>, vector<8x128xf32>
    tpu.vector_store %arg9[%c0_18, %c0_19], %101 {strides = array<i32>} : memref<8x128xf32, #tpu.memory_space<vmem>>, vector<8x128xf32>,
    %103 = vector.extract_strided_slice %1 {offsets = [0, 15], sizes = [8, 128], strides = [1, 1]} : vector<8x256xf32> to vector<8x128xf32>
    %104 = arith.addf %101, %103 : vector<8x128xf32>
    %c0_20 = arith.constant 0 : index
    %c0_21 = arith.constant 0 : index
    %105 = vector.load %arg10[%c0_20, %c0_21] : memref<8x128xf32, #tpu.memory_space<vmem>>, vector<8x128xf32>
    tpu.vector_store %arg10[%c0_20, %c0_21], %104 {strides = array<i32>} : memref<8x128xf32, #tpu.memory_space<vmem>>, vector<8x128xf32>,
    %106 = vector.shape_cast %101 : vector<8x128xf32> to vector<8x1x128xf32>
    %107 = vector.broadcast %106 : vector<8x1x128xf32> to vector<8x8x128xf32>
    %108 = arith.mulf %0, %107 : vector<8x8x128xf32>
    %cst_22 = arith.constant dense<0.000000e+00> : vector<8x8xf32>
    %109 = vector.multi_reduction <add>, %108, %cst_22 [2] : vector<8x8x128xf32> to vector<8x8xf32>
    %c0_23 = arith.constant 0 : index
    %c0_24 = arith.constant 0 : index
    %110 = vector.load %arg8[%c0_23, %c0_24] : memref<8x8xf32, #tpu.memory_space<vmem>>, vector<8x8xf32>
    tpu.vector_store %arg8[%c0_23, %c0_24], %109 {strides = array<i32>} : memref<8x8xf32, #tpu.memory_space<vmem>>, vector<8x8xf32>,
    return
  }
  func.func @transform_0(%arg0: i32) -> (i32, i32) {
    %c0_i32 = arith.constant 0 : i32
    %c0_i32_0 = arith.constant 0 : i32
    return %arg0, %c0_i32 : i32, i32
  }
  func.func @transform_1(%arg0: i32) -> (i32, i32) {
    %c0_i32 = arith.constant 0 : i32
    %c0_i32_0 = arith.constant 0 : i32
    %c0_i32_1 = arith.constant 0 : i32
    return %c0_i32, %c0_i32_0 : i32, i32
  }
  func.func @transform_2(%arg0: i32) -> (i32, i32) {
    %c0_i32 = arith.constant 0 : i32
    %c0_i32_0 = arith.constant 0 : i32
    %c0_i32_1 = arith.constant 0 : i32
    return %c0_i32, %c0_i32_0 : i32, i32
  }
  func.func @transform_3(%arg0: i32) -> (i32, i32) {
    %c0_i32 = arith.constant 0 : i32
    %c0_i32_0 = arith.constant 0 : i32
    %c0_i32_1 = arith.constant 0 : i32
    return %c0_i32, %c0_i32_0 : i32, i32
  }
  func.func @transform_4(%arg0: i32) -> (i32, i32) {
    %c0_i32 = arith.constant 0 : i32
    %c0_i32_0 = arith.constant 0 : i32
    return %arg0, %c0_i32 : i32, i32
  }
  func.func @transform_5(%arg0: i32) -> (i32, i32) {
    %c0_i32 = arith.constant 0 : i32
    %c0_i32_0 = arith.constant 0 : i32
    return %arg0, %c0_i32 : i32, i32
  }
  func.func @transform_6(%arg0: i32) -> (i32, i32, i32) {
    %c0_i32 = arith.constant 0 : i32
    %c0_i32_0 = arith.constant 0 : i32
    %c0_i32_1 = arith.constant 0 : i32
    return %arg0, %c0_i32, %c0_i32_0 : i32, i32, i32
  }
  func.func @transform_7(%arg0: i32) -> (i32, i32) {
    %c0_i32 = arith.constant 0 : i32
    %c0_i32_0 = arith.constant 0 : i32
    return %arg0, %c0_i32 : i32, i32
  }
  func.func @transform_8(%arg0: i32) -> (i32, i32) {
    %c0_i32 = arith.constant 0 : i32
    %c0_i32_0 = arith.constant 0 : i32
    return %arg0, %c0_i32 : i32, i32
  }
  func.func @transform_9(%arg0: i32) -> (i32, i32) {
    %c0_i32 = arith.constant 0 : i32
    %c0_i32_0 = arith.constant 0 : i32
    return %arg0, %c0_i32 : i32, i32
  }
}

</mosaic_0001>

<llo_original>
// kernel: tpu_custom_call.1
$region0: #{tpu_custom_call.1}
  #allocation0 [shape = 'u32[]', space=smem, size = 0x4, offset = 0x4, fixed_abs, tag = 'smem constant byte address 0x4 - core index']
  #allocation1 [shape = 'u32[144,128]{1,0:T(1,128)}', space=vmem, size = 0x12000, scoped, tag = 'internal scratch']
  %s0 = inlined_call_operand.vmem [shape: f32[8,32], index: 0, kind: input, shape index: {}]
  %s1 = inlined_call_operand.vmem [shape: bf16[32,8], index: 1, kind: input, shape index: {}]
  %s2 = inlined_call_operand.vmem [shape: bf16[32,32], index: 2, kind: input, shape index: {}]
  %s3 = inlined_call_operand.vmem [shape: f32[32,1], index: 3, kind: input, shape index: {}]
  %s4 = inlined_call_operand.vmem [shape: f32[8,256], index: 4, kind: input, shape index: {}]
  %s5 = inlined_call_operand.vmem [shape: f32[8,128], index: 5, kind: input, shape index: {}]
  %s6 = inlined_call_operand.hbm [shape: f32[8,8,128], index: 6, kind: input, shape index: {}]
  %s7 = inlined_call_operand.hbm [shape: f32[8,8], index: 7, kind: output, shape index: {0}]
  %s8 = inlined_call_operand.hbm [shape: f32[8,128], index: 8, kind: output, shape index: {1}]
  %s9 = inlined_call_operand.hbm [shape: f32[8,128], index: 9, kind: output, shape index: {2}]
  %10 = xla_tuple %s7, %s8, %s9
  %s11 = sld [smem:[#allocation0]]
  $region58: #{tpu_custom_call.1} parent=0
    _
  %s13 = ssub.s32 1, %s11
  %s14 = scalar_select 0, %s13, %s11
  $region1: #{tpu_custom_call.1} parent=0
    #allocation2 [shape = 'u8[32768]{0}', space=vmem, size = 0x8000, scoped, tag = 'input window, operand 6, single buffered']
    #allocation3 [shape = 's32[1]{0}', space=sflag, size = 0x4, scoped, tag = 'scoped memory for tpu_custom_call.1']
    #allocation4 [shape = 's32[1]{0}', space=sflag, size = 0x4, scoped, tag = 'scoped memory for tpu_custom_call.1']
    #allocation5 [shape = 'u8[4096]{0}', space=vmem, size = 0x1000, scoped, tag = 'output window, operand 0, single buffered']
    #allocation6 [shape = 'u8[4096]{0}', space=vmem, size = 0x1000, scoped, tag = 'output window, operand 1, single buffered']
    #allocation7 [shape = 's32[1]{0}', space=sflag, size = 0x4, scoped, tag = 'scoped memory for tpu_custom_call.1']
    #allocation8 [shape = 'u8[4096]{0}', space=vmem, size = 0x1000, scoped, tag = 'output window, operand 2, single buffered']
    %15 = vsyncpa [#allocation3], 0
    %16 = vsyncpa [#allocation4], 0
    %17 = vsyncpa [#allocation7], 0
    // Predicated region
    $region2: #{tpu_custom_call.1} parent=1 // pred_check
      _
    $region3: #{tpu_custom_call.1} parent=1 // pred_check_branch
      %19 = sbr.rel (0) target = $region5
    $region4: #{tpu_custom_call.1} parent=1 // pred_region
      _
    $region5: #{tpu_custom_call.1} parent=1 // pred_fallthru
      _
    // Predicated region
    $region6: #{tpu_custom_call.1} parent=1 // pred_check
      _
    $region7: #{tpu_custom_call.1} parent=1 // pred_check_branch
      %21 = sbr.rel (0) target = $region9
    $region8: #{tpu_custom_call.1} parent=1 // pred_region
      _
    $region9: #{tpu_custom_call.1} parent=1 // pred_fallthru
      _
    // Predicated region
    $region10: #{tpu_custom_call.1} parent=1 // pred_check
      _
    $region11: #{tpu_custom_call.1} parent=1 // pred_check_branch
      %23 = sbr.rel (0) target = $region13
    $region12: #{tpu_custom_call.1} parent=1 // pred_region
      _
    $region13: #{tpu_custom_call.1} parent=1 // pred_fallthru
      _
    // Predicated region
    $region14: #{tpu_custom_call.1} parent=1 // pred_check
      _
    $region15: #{tpu_custom_call.1} parent=1 // pred_check_branch
      %25 = sbr.rel (0) target = $region17
    $region16: #{tpu_custom_call.1} parent=1 // pred_region
      _
    $region17: #{tpu_custom_call.1} parent=1 // pred_fallthru
      _
    // Predicated region
    $region18: #{tpu_custom_call.1} parent=1 // pred_check
      _
    $region19: #{tpu_custom_call.1} parent=1 // pred_check_branch
      %27 = sbr.rel (0) target = $region21
    $region20: #{tpu_custom_call.1} parent=1 // pred_region
      _
    $region21: #{tpu_custom_call.1} parent=1 // pred_fallthru
      _
    // Predicated region
    $region22: #{tpu_custom_call.1} parent=1 // pred_check
      _
    $region23: #{tpu_custom_call.1} parent=1 // pred_check_branch
      %29 = sbr.rel (0) target = $region25
    $region24: #{tpu_custom_call.1} parent=1 // pred_region
      _
    $region25: #{tpu_custom_call.1} parent=1 // pred_fallthru
      _
    // Predicated region
    $region26: #{tpu_custom_call.1} parent=1 // pred_check
      _
    $region27: #{tpu_custom_call.1} parent=1 // pred_check_branch
      %31 = sbr.rel (0) target = $region29
    $region28: #{tpu_custom_call.1} parent=1 // pred_region
      %s33 = ssub.s32 1024, 1024
      %34 = vsyncadd [#allocation3], %s33
      %s35 = sshll.u32 [#allocation2], 4
      %s36 = int_to_ptr.vmem [resolvable:$true] %s35
      %41 = dma.hbm_to_vmem [thread:$0]  %s6, 1024, %s36, [#allocation3], 128, 128, 8
    $region29: #{tpu_custom_call.1} parent=1 // pred_fallthru
      _
    // Predicated region
    $region30: #{tpu_custom_call.1} parent=1 // pred_check
      _
    $region31: #{tpu_custom_call.1} parent=1 // pred_check_branch
      %43 = sbr.rel (0) target = $region33
    $region32: #{tpu_custom_call.1} parent=1 // pred_region
      %44 = dma.done [#allocation3], 1024
    $region33: #{tpu_custom_call.1} parent=1 // pred_fallthru
      _
    %v46 = vld [vmem:[#allocation2] sm:$0xff]
    %v47 = vld [vmem:[#allocation2 + $0x8] sm:$0xff]
    %v48 = vld [vmem:[#allocation2 + $0x10] sm:$0xff]
    %v49 = vld [vmem:[#allocation2 + $0x18] sm:$0xff]
    %v50 = vld [vmem:[#allocation2 + $0x20] sm:$0xff]
    %v51 = vld [vmem:[#allocation2 + $0x28] sm:$0xff]
    %v52 = vld [vmem:[#allocation2 + $0x30] sm:$0xff]
    %v53 = vld [vmem:[#allocation2 + $0x38] sm:$0xff]
    %v54 = vld [vmem:[%s4] sm:$0xff]
    %v55 = vld [vmem:[%s4 + $0x8] sm:$0xff]
    %v56 = vld [vmem:[%s1] sm:$0xf]
    %v57 = vld [vmem:[%s1 + $0x4] sm:$0xf]
    %v58 = vld [vmem:[%s1 + $0x8] sm:$0xf]
    %v59 = vld [vmem:[%s1 + $0xc] sm:$0xf]
    %v60 = vpack.c.bf16 %v46, %v46
    %v61 = vpack.c.bf16 %v47, %v47
    %v62 = vpack.c.bf16 %v48, %v48
    %v63 = vpack.c.bf16 %v49, %v49
    %v64 = vpack.c.bf16 %v50, %v50
    %v65 = vpack.c.bf16 %v51, %v51
    %v66 = vpack.c.bf16 %v52, %v52
    %v67 = vpack.c.bf16 %v53, %v53
    %v69 = vcombine.high %v54, %v54
    %v71 = vunpack.c.l.s4 1966171168
    %v72 = vunpack.c.0.s8 %v71
    %v73 = vlaneseq
    %v74 = vshrl.u32 %v73, 7
    %v75 = vsub.s32 %v72, %v74
    %v76 = vrot.slane %v54, %v75
    %v78 = vunpack.c.l.s4 1966171168
    %v79 = vunpack.c.0.s8 %v78
    %v80 = vlaneseq
    %v81 = vshrl.u32 %v80, 7
    %v82 = vsub.s32 %v79, %v81
    %v83 = vrot.slane %v69, %v82
    %v84 = vcombine.high %v76, %v76
    %v85 = vcombine.high %v83, %v83
    %v87 = vunpack.c.l.s4 1966171168
    %v88 = vunpack.c.0.s8 %v87
    %v89 = vlaneseq
    %v90 = vshrl.u32 %v89, 7
    %v91 = vsub.s32 %v88, %v90
    %v92 = vrot.slane %v76, %v91
    %v94 = vunpack.c.l.s4 1966171168
    %v95 = vunpack.c.0.s8 %v94
    %v96 = vlaneseq
    %v97 = vshrl.u32 %v96, 7
    %v98 = vsub.s32 %v95, %v97
    %v99 = vrot.slane %v83, %v98
    %v101 = vunpack.c.l.s4 1966171168
    %v102 = vunpack.c.0.s8 %v101
    %v103 = vlaneseq
    %v104 = vshrl.u32 %v103, 7
    %v105 = vsub.s32 %v102, %v104
    %v106 = vrot.slane %v84, %v105
    %v108 = vunpack.c.l.s4 1966171168
    %v109 = vunpack.c.0.s8 %v108
    %v110 = vlaneseq
    %v111 = vshrl.u32 %v110, 7
    %v112 = vsub.s32 %v109, %v111
    %v113 = vrot.slane %v85, %v112
    %v114 = vcombine.high %v92, %v92
    %v115 = vcombine.high %v99, %v99
    %v116 = vcombine.high %v106, %v106
    %v117 = vcombine.high %v113, %v113
    %v127 = vcombine.low %v54, %v55
    %v128 = vcombine.high %v54, %v55
    %v130 = vunpack.c.l.s4 1966171168
    %v131 = vunpack.c.0.s8 %v130
    %v132 = vlaneseq
    %v133 = vshrl.u32 %v132, 7
    %v134 = vsub.s32 %v131, %v133
    %v135 = vrot.slane %v127, %v134
    %v137 = vunpack.c.l.s4 1966171168
    %v138 = vunpack.c.0.s8 %v137
    %v139 = vlaneseq
    %v140 = vshrl.u32 %v139, 7
    %v141 = vsub.s32 %v138, %v140
    %v142 = vrot.slane %v128, %v141
    %v143 = vcombine.high %v135, %v135
    %v144 = vcombine.high %v142, %v142
    %v146 = vunpack.c.l.s4 1966171168
    %v147 = vunpack.c.0.s8 %v146
    %v148 = vlaneseq
    %v149 = vshrl.u32 %v148, 7
    %v150 = vsub.s32 %v147, %v149
    %v151 = vrot.slane %v135, %v150
    %v153 = vunpack.c.l.s4 1966171168
    %v154 = vunpack.c.0.s8 %v153
    %v155 = vlaneseq
    %v156 = vshrl.u32 %v155, 7
    %v157 = vsub.s32 %v154, %v156
    %v158 = vrot.slane %v142, %v157
    %v160 = vunpack.c.l.s4 1966171168
    %v161 = vunpack.c.0.s8 %v160
    %v162 = vlaneseq
    %v163 = vshrl.u32 %v162, 7
    %v164 = vsub.s32 %v161, %v163
    %v165 = vrot.slane %v143, %v164
    %v167 = vunpack.c.l.s4 1966171168
    %v168 = vunpack.c.0.s8 %v167
    %v169 = vlaneseq
    %v170 = vshrl.u32 %v169, 7
    %v171 = vsub.s32 %v168, %v170
    %v172 = vrot.slane %v144, %v171
    %v173 = vcombine.high %v151, %v151
    %v174 = vcombine.high %v158, %v158
    %v175 = vcombine.high %v165, %v165
    %v176 = vcombine.high %v172, %v172
    %v177 = vlaneseq
    %v178 = vshrl.u32 %v177, 7
    %v179 = vsub.s32 0, %v178
    %v180 = vrot.slane %v151, %v179
    %v181 = vlaneseq
    %v182 = vshrl.u32 %v181, 7
    %v183 = vsub.s32 1, %v182
    %v184 = vrot.slane %v151, %v183
    %v185 = vlaneseq
    %v186 = vshrl.u32 %v185, 7
    %v187 = vsub.s32 0, %v186
    %v188 = vrot.slane %v165, %v187
    %v189 = vlaneseq
    %v190 = vshrl.u32 %v189, 7
    %v191 = vsub.s32 1, %v190
    %v192 = vrot.slane %v165, %v191
    %v193 = vlaneseq
    %v194 = vshrl.u32 %v193, 7
    %v195 = vsub.s32 0, %v194
    %v196 = vrot.slane %v173, %v195
    %v197 = vlaneseq
    %v198 = vshrl.u32 %v197, 7
    %v199 = vsub.s32 1, %v198
    %v200 = vrot.slane %v173, %v199
    %v201 = vlaneseq
    %v202 = vshrl.u32 %v201, 7
    %v203 = vsub.s32 0, %v202
    %v204 = vrot.slane %v175, %v203
    %v205 = vlaneseq
    %v206 = vshrl.u32 %v205, 7
    %v207 = vsub.s32 1, %v206
    %v208 = vrot.slane %v175, %v207
    %v209 = vlaneseq
    %v210 = vshrl.u32 %v209, 7
    %v211 = vsub.s32 0, %v210
    %v212 = vrot.slane %v158, %v211
    %v213 = vlaneseq
    %v214 = vshrl.u32 %v213, 7
    %v215 = vsub.s32 1, %v214
    %v216 = vrot.slane %v158, %v215
    %v217 = vlaneseq
    %v218 = vshrl.u32 %v217, 7
    %v219 = vsub.s32 0, %v218
    %v220 = vrot.slane %v172, %v219
    %v221 = vlaneseq
    %v222 = vshrl.u32 %v221, 7
    %v223 = vsub.s32 1, %v222
    %v224 = vrot.slane %v172, %v223
    %v225 = vlaneseq
    %v226 = vshrl.u32 %v225, 7
    %v227 = vsub.s32 0, %v226
    %v228 = vrot.slane %v174, %v227
    %v229 = vlaneseq
    %v230 = vshrl.u32 %v229, 7
    %v231 = vsub.s32 1, %v230
    %v232 = vrot.slane %v174, %v231
    %v233 = vlaneseq
    %v234 = vshrl.u32 %v233, 7
    %v235 = vsub.s32 0, %v234
    %v236 = vrot.slane %v176, %v235
    %v237 = vlaneseq
    %v238 = vshrl.u32 %v237, 7
    %v239 = vsub.s32 1, %v238
    %v240 = vrot.slane %v176, %v239
    %241 = vrot.lane.b32.xlu0 %v180, 127
    %v242 = vpop.permute.xlu0 %241
    %243 = vrot.lane.b32.xlu0 %v184, 127
    %v244 = vpop.permute.xlu0 %243
    %245 = vrot.lane.b32.xlu0 %v188, 127
    %v246 = vpop.permute.xlu0 %245
    %247 = vrot.lane.b32.xlu0 %v192, 127
    %v248 = vpop.permute.xlu0 %247
    %249 = vrot.lane.b32.xlu0 %v196, 127
    %v250 = vpop.permute.xlu0 %249
    %251 = vrot.lane.b32.xlu0 %v200, 127
    %v252 = vpop.permute.xlu0 %251
    %253 = vrot.lane.b32.xlu0 %v204, 127
    %v254 = vpop.permute.xlu0 %253
    %255 = vrot.lane.b32.xlu0 %v208, 127
    %v256 = vpop.permute.xlu0 %255
    %257 = vrot.lane.b32.xlu0 %v212, 127
    %v258 = vpop.permute.xlu0 %257
    %259 = vrot.lane.b32.xlu0 %v216, 127
    %v260 = vpop.permute.xlu0 %259
    %261 = vrot.lane.b32.xlu0 %v220, 127
    %v262 = vpop.permute.xlu0 %261
    %263 = vrot.lane.b32.xlu0 %v224, 127
    %v264 = vpop.permute.xlu0 %263
    %265 = vrot.lane.b32.xlu0 %v228, 127
    %v266 = vpop.permute.xlu0 %265
    %267 = vrot.lane.b32.xlu0 %v232, 127
    %v268 = vpop.permute.xlu0 %267
    %269 = vrot.lane.b32.xlu0 %v236, 127
    %v270 = vpop.permute.xlu0 %269
    %271 = vrot.lane.b32.xlu0 %v240, 127
    %v272 = vpop.permute.xlu0 %271
    %vm273 = vcmask 1039360
    %v274 = vsel %vm273, %v242, %v244
    %v275 = vsel %vm273, %v246, %v248
    %v276 = vsel %vm273, %v250, %v252
    %v277 = vsel %vm273, %v254, %v256
    %v278 = vsel %vm273, %v258, %v260
    %v279 = vsel %vm273, %v262, %v264
    %v280 = vsel %vm273, %v266, %v268
    %v281 = vsel %vm273, %v270, %v272
    %290 = vrot.lane.b32.xlu0 %v180, 126
    %v291 = vpop.permute.xlu0 %290
    %292 = vrot.lane.b32.xlu0 %v184, 126
    %v293 = vpop.permute.xlu0 %292
    %294 = vrot.lane.b32.xlu0 %v188, 126
    %v295 = vpop.permute.xlu0 %294
    %296 = vrot.lane.b32.xlu0 %v192, 126
    %v297 = vpop.permute.xlu0 %296
    %298 = vrot.lane.b32.xlu0 %v196, 126
    %v299 = vpop.permute.xlu0 %298
    %300 = vrot.lane.b32.xlu0 %v200, 126
    %v301 = vpop.permute.xlu0 %300
    %302 = vrot.lane.b32.xlu0 %v204, 126
    %v303 = vpop.permute.xlu0 %302
    %304 = vrot.lane.b32.xlu0 %v208, 126
    %v305 = vpop.permute.xlu0 %304
    %306 = vrot.lane.b32.xlu0 %v212, 126
    %v307 = vpop.permute.xlu0 %306
    %308 = vrot.lane.b32.xlu0 %v216, 126
    %v309 = vpop.permute.xlu0 %308
    %310 = vrot.lane.b32.xlu0 %v220, 126
    %v311 = vpop.permute.xlu0 %310
    %312 = vrot.lane.b32.xlu0 %v224, 126
    %v313 = vpop.permute.xlu0 %312
    %314 = vrot.lane.b32.xlu0 %v228, 126
    %v315 = vpop.permute.xlu0 %314
    %316 = vrot.lane.b32.xlu0 %v232, 126
    %v317 = vpop.permute.xlu0 %316
    %318 = vrot.lane.b32.xlu0 %v236, 126
    %v319 = vpop.permute.xlu0 %318
    %320 = vrot.lane.b32.xlu0 %v240, 126
    %v321 = vpop.permute.xlu0 %320
    %vm322 = vcmask 1031168
    %v323 = vsel %vm322, %v291, %v293
    %v324 = vsel %vm322, %v295, %v297
    %v325 = vsel %vm322, %v299, %v301
    %v326 = vsel %vm322, %v303, %v305
    %v327 = vsel %vm322, %v307, %v309
    %v328 = vsel %vm322, %v311, %v313
    %v329 = vsel %vm322, %v315, %v317
    %v330 = vsel %vm322, %v319, %v321
    %339 = vrot.lane.b32.xlu0 %v180, 125
    %v340 = vpop.permute.xlu0 %339
    %341 = vrot.lane.b32.xlu0 %v184, 125
    %v342 = vpop.permute.xlu0 %341
    %343 = vrot.lane.b32.xlu0 %v188, 125
    %v344 = vpop.permute.xlu0 %343
    %345 = vrot.lane.b32.xlu0 %v192, 125
    %v346 = vpop.permute.xlu0 %345
    %347 = vrot.lane.b32.xlu0 %v196, 125
    %v348 = vpop.permute.xlu0 %347
    %349 = vrot.lane.b32.xlu0 %v200, 125
    %v350 = vpop.permute.xlu0 %349
    %351 = vrot.lane.b32.xlu0 %v204, 125
    %v352 = vpop.permute.xlu0 %351
    %353 = vrot.lane.b32.xlu0 %v208, 125
    %v354 = vpop.permute.xlu0 %353
    %355 = vrot.lane.b32.xlu0 %v212, 125
    %v356 = vpop.permute.xlu0 %355
    %357 = vrot.lane.b32.xlu0 %v216, 125
    %v358 = vpop.permute.xlu0 %357
    %359 = vrot.lane.b32.xlu0 %v220, 125
    %v360 = vpop.permute.xlu0 %359
    %361 = vrot.lane.b32.xlu0 %v224, 125
    %v362 = vpop.permute.xlu0 %361
    %363 = vrot.lane.b32.xlu0 %v228, 125
    %v364 = vpop.permute.xlu0 %363
    %365 = vrot.lane.b32.xlu0 %v232, 125
    %v366 = vpop.permute.xlu0 %365
    %367 = vrot.lane.b32.xlu0 %v236, 125
    %v368 = vpop.permute.xlu0 %367
    %369 = vrot.lane.b32.xlu0 %v240, 125
    %v370 = vpop.permute.xlu0 %369
    %vm371 = vcmask 1022976
    %v372 = vsel %vm371, %v340, %v342
    %v373 = vsel %vm371, %v344, %v346
    %v374 = vsel %vm371, %v348, %v350
    %v375 = vsel %vm371, %v352, %v354
    %v376 = vsel %vm371, %v356, %v358
    %v377 = vsel %vm371, %v360, %v362
    %v378 = vsel %vm371, %v364, %v366
    %v379 = vsel %vm371, %v368, %v370
    %388 = vrot.lane.b32.xlu0 %v180, 124
    %v389 = vpop.permute.xlu0 %388
    %390 = vrot.lane.b32.xlu0 %v184, 124
    %v391 = vpop.permute.xlu0 %390
    %392 = vrot.lane.b32.xlu0 %v188, 124
    %v393 = vpop.permute.xlu0 %392
    %394 = vrot.lane.b32.xlu0 %v192, 124
    %v395 = vpop.permute.xlu0 %394
    %396 = vrot.lane.b32.xlu0 %v196, 124
    %v397 = vpop.permute.xlu0 %396
    %398 = vrot.lane.b32.xlu0 %v200, 124
    %v399 = vpop.permute.xlu0 %398
    %400 = vrot.lane.b32.xlu0 %v204, 124
    %v401 = vpop.permute.xlu0 %400
    %402 = vrot.lane.b32.xlu0 %v208, 124
    %v403 = vpop.permute.xlu0 %402
    %404 = vrot.lane.b32.xlu0 %v212, 124
    %v405 = vpop.permute.xlu0 %404
    %406 = vrot.lane.b32.xlu0 %v216, 124
    %v407 = vpop.permute.xlu0 %406
    %408 = vrot.lane.b32.xlu0 %v220, 124
    %v409 = vpop.permute.xlu0 %408
    %410 = vrot.lane.b32.xlu0 %v224, 124
    %v411 = vpop.permute.xlu0 %410
    %412 = vrot.lane.b32.xlu0 %v228, 124
    %v413 = vpop.permute.xlu0 %412
    %414 = vrot.lane.b32.xlu0 %v232, 124
    %v415 = vpop.permute.xlu0 %414
    %416 = vrot.lane.b32.xlu0 %v236, 124
    %v417 = vpop.permute.xlu0 %416
    %418 = vrot.lane.b32.xlu0 %v240, 124
    %v419 = vpop.permute.xlu0 %418
    %vm420 = vcmask 1014784
    %v421 = vsel %vm420, %v389, %v391
    %v422 = vsel %vm420, %v393, %v395
    %v423 = vsel %vm420, %v397, %v399
    %v424 = vsel %vm420, %v401, %v403
    %v425 = vsel %vm420, %v405, %v407
    %v426 = vsel %vm420, %v409, %v411
    %v427 = vsel %vm420, %v413, %v415
    %v428 = vsel %vm420, %v417, %v419
    %437 = vrot.lane.b32.xlu0 %v180, 123
    %v438 = vpop.permute.xlu0 %437
    %439 = vrot.lane.b32.xlu0 %v184, 123
    %v440 = vpop.permute.xlu0 %439
    %441 = vrot.lane.b32.xlu0 %v188, 123
    %v442 = vpop.permute.xlu0 %441
    %443 = vrot.lane.b32.xlu0 %v192, 123
    %v444 = vpop.permute.xlu0 %443
    %445 = vrot.lane.b32.xlu0 %v196, 123
    %v446 = vpop.permute.xlu0 %445
    %447 = vrot.lane.b32.xlu0 %v200, 123
    %v448 = vpop.permute.xlu0 %447
    %449 = vrot.lane.b32.xlu0 %v204, 123
    %v450 = vpop.permute.xlu0 %449
    %451 = vrot.lane.b32.xlu0 %v208, 123
    %v452 = vpop.permute.xlu0 %451
    %453 = vrot.lane.b32.xlu0 %v212, 123
    %v454 = vpop.permute.xlu0 %453
    %455 = vrot.lane.b32.xlu0 %v216, 123
    %v456 = vpop.permute.xlu0 %455
    %457 = vrot.lane.b32.xlu0 %v220, 123
    %v458 = vpop.permute.xlu0 %457
    %459 = vrot.lane.b32.xlu0 %v224, 123
    %v460 = vpop.permute.xlu0 %459
    %461 = vrot.lane.b32.xlu0 %v228, 123
    %v462 = vpop.permute.xlu0 %461
    %463 = vrot.lane.b32.xlu0 %v232, 123
    %v464 = vpop.permute.xlu0 %463
    %465 = vrot.lane.b32.xlu0 %v236, 123
    %v466 = vpop.permute.xlu0 %465
    %467 = vrot.lane.b32.xlu0 %v240, 123
    %v468 = vpop.permute.xlu0 %467
    %vm469 = vcmask 1006592
    %v470 = vsel %vm469, %v438, %v440
    %v471 = vsel %vm469, %v442, %v444
    %v472 = vsel %vm469, %v446, %v448
    %v473 = vsel %vm469, %v450, %v452
    %v474 = vsel %vm469, %v454, %v456
    %v475 = vsel %vm469, %v458, %v460
    %v476 = vsel %vm469, %v462, %v464
    %v477 = vsel %vm469, %v466, %v468
    %486 = vrot.lane.b32.xlu0 %v180, 122
    %v487 = vpop.permute.xlu0 %486
    %488 = vrot.lane.b32.xlu0 %v184, 122
    %v489 = vpop.permute.xlu0 %488
    %490 = vrot.lane.b32.xlu0 %v188, 122
    %v491 = vpop.permute.xlu0 %490
    %492 = vrot.lane.b32.xlu0 %v192, 122
    %v493 = vpop.permute.xlu0 %492
    %494 = vrot.lane.b32.xlu0 %v196, 122
    %v495 = vpop.permute.xlu0 %494
    %496 = vrot.lane.b32.xlu0 %v200, 122
    %v497 = vpop.permute.xlu0 %496
    %498 = vrot.lane.b32.xlu0 %v204, 122
    %v499 = vpop.permute.xlu0 %498
    %500 = vrot.lane.b32.xlu0 %v208, 122
    %v501 = vpop.permute.xlu0 %500
    %502 = vrot.lane.b32.xlu0 %v212, 122
    %v503 = vpop.permute.xlu0 %502
    %504 = vrot.lane.b32.xlu0 %v216, 122
    %v505 = vpop.permute.xlu0 %504
    %506 = vrot.lane.b32.xlu0 %v220, 122
    %v507 = vpop.permute.xlu0 %506
    %508 = vrot.lane.b32.xlu0 %v224, 122
    %v509 = vpop.permute.xlu0 %508
    %510 = vrot.lane.b32.xlu0 %v228, 122
    %v511 = vpop.permute.xlu0 %510
    %512 = vrot.lane.b32.xlu0 %v232, 122
    %v513 = vpop.permute.xlu0 %512
    %514 = vrot.lane.b32.xlu0 %v236, 122
    %v515 = vpop.permute.xlu0 %514
    %516 = vrot.lane.b32.xlu0 %v240, 122
    %v517 = vpop.permute.xlu0 %516
    %vm518 = vcmask 998400
    %v519 = vsel %vm518, %v487, %v489
    %v520 = vsel %vm518, %v491, %v493
    %v521 = vsel %vm518, %v495, %v497
    %v522 = vsel %vm518, %v499, %v501
    %v523 = vsel %vm518, %v503, %v505
    %v524 = vsel %vm518, %v507, %v509
    %v525 = vsel %vm518, %v511, %v513
    %v526 = vsel %vm518, %v515, %v517
    %535 = vrot.lane.b32.xlu0 %v180, 121
    %v536 = vpop.permute.xlu0 %535
    %537 = vrot.lane.b32.xlu0 %v184, 121
    %v538 = vpop.permute.xlu0 %537
    %539 = vrot.lane.b32.xlu0 %v188, 121
    %v540 = vpop.permute.xlu0 %539
    %541 = vrot.lane.b32.xlu0 %v192, 121
    %v542 = vpop.permute.xlu0 %541
    %543 = vrot.lane.b32.xlu0 %v196, 121
    %v544 = vpop.permute.xlu0 %543
    %545 = vrot.lane.b32.xlu0 %v200, 121
    %v546 = vpop.permute.xlu0 %545
    %547 = vrot.lane.b32.xlu0 %v204, 121
    %v548 = vpop.permute.xlu0 %547
    %549 = vrot.lane.b32.xlu0 %v208, 121
    %v550 = vpop.permute.xlu0 %549
    %551 = vrot.lane.b32.xlu0 %v212, 121
    %v552 = vpop.permute.xlu0 %551
    %553 = vrot.lane.b32.xlu0 %v216, 121
    %v554 = vpop.permute.xlu0 %553
    %555 = vrot.lane.b32.xlu0 %v220, 121
    %v556 = vpop.permute.xlu0 %555
    %557 = vrot.lane.b32.xlu0 %v224, 121
    %v558 = vpop.permute.xlu0 %557
    %559 = vrot.lane.b32.xlu0 %v228, 121
    %v560 = vpop.permute.xlu0 %559
    %561 = vrot.lane.b32.xlu0 %v232, 121
    %v562 = vpop.permute.xlu0 %561
    %563 = vrot.lane.b32.xlu0 %v236, 121
    %v564 = vpop.permute.xlu0 %563
    %565 = vrot.lane.b32.xlu0 %v240, 121
    %v566 = vpop.permute.xlu0 %565
    %vm567 = vcmask 990208
    %v568 = vsel %vm567, %v536, %v538
    %v569 = vsel %vm567, %v540, %v542
    %v570 = vsel %vm567, %v544, %v546
    %v571 = vsel %vm567, %v548, %v550
    %v572 = vsel %vm567, %v552, %v554
    %v573 = vsel %vm567, %v556, %v558
    %v574 = vsel %vm567, %v560, %v562
    %v575 = vsel %vm567, %v564, %v566
    %584 = vrot.lane.b32.xlu0 %v180, 120
    %v585 = vpop.permute.xlu0 %584
    %586 = vrot.lane.b32.xlu0 %v184, 120
    %v587 = vpop.permute.xlu0 %586
    %588 = vrot.lane.b32.xlu0 %v188, 120
    %v589 = vpop.permute.xlu0 %588
    %590 = vrot.lane.b32.xlu0 %v192, 120
    %v591 = vpop.permute.xlu0 %590
    %592 = vrot.lane.b32.xlu0 %v196, 120
    %v593 = vpop.permute.xlu0 %592
    %594 = vrot.lane.b32.xlu0 %v200, 120
    %v595 = vpop.permute.xlu0 %594
    %596 = vrot.lane.b32.xlu0 %v204, 120
    %v597 = vpop.permute.xlu0 %596
    %598 = vrot.lane.b32.xlu0 %v208, 120
    %v599 = vpop.permute.xlu0 %598
    %600 = vrot.lane.b32.xlu0 %v212, 120
    %v601 = vpop.permute.xlu0 %600
    %602 = vrot.lane.b32.xlu0 %v216, 120
    %v603 = vpop.permute.xlu0 %602
    %604 = vrot.lane.b32.xlu0 %v220, 120
    %v605 = vpop.permute.xlu0 %604
    %606 = vrot.lane.b32.xlu0 %v224, 120
    %v607 = vpop.permute.xlu0 %606
    %608 = vrot.lane.b32.xlu0 %v228, 120
    %v609 = vpop.permute.xlu0 %608
    %610 = vrot.lane.b32.xlu0 %v232, 120
    %v611 = vpop.permute.xlu0 %610
    %612 = vrot.lane.b32.xlu0 %v236, 120
    %v613 = vpop.permute.xlu0 %612
    %614 = vrot.lane.b32.xlu0 %v240, 120
    %v615 = vpop.permute.xlu0 %614
    %vm616 = vcmask 982016
    %v617 = vsel %vm616, %v585, %v587
    %v618 = vsel %vm616, %v589, %v591
    %v619 = vsel %vm616, %v593, %v595
    %v620 = vsel %vm616, %v597, %v599
    %v621 = vsel %vm616, %v601, %v603
    %v622 = vsel %vm616, %v605, %v607
    %v623 = vsel %vm616, %v609, %v611
    %v624 = vsel %vm616, %v613, %v615
    %633 = vrot.lane.b32.xlu0 %v180, 119
    %v634 = vpop.permute.xlu0 %633
    %635 = vrot.lane.b32.xlu0 %v184, 119
    %v636 = vpop.permute.xlu0 %635
    %637 = vrot.lane.b32.xlu0 %v188, 119
    %v638 = vpop.permute.xlu0 %637
    %639 = vrot.lane.b32.xlu0 %v192, 119
    %v640 = vpop.permute.xlu0 %639
    %641 = vrot.lane.b32.xlu0 %v196, 119
    %v642 = vpop.permute.xlu0 %641
    %643 = vrot.lane.b32.xlu0 %v200, 119
    %v644 = vpop.permute.xlu0 %643
    %645 = vrot.lane.b32.xlu0 %v204, 119
    %v646 = vpop.permute.xlu0 %645
    %647 = vrot.lane.b32.xlu0 %v208, 119
    %v648 = vpop.permute.xlu0 %647
    %649 = vrot.lane.b32.xlu0 %v212, 119
    %v650 = vpop.permute.xlu0 %649
    %651 = vrot.lane.b32.xlu0 %v216, 119
    %v652 = vpop.permute.xlu0 %651
    %653 = vrot.lane.b32.xlu0 %v220, 119
    %v654 = vpop.permute.xlu0 %653
    %655 = vrot.lane.b32.xlu0 %v224, 119
    %v656 = vpop.permute.xlu0 %655
    %657 = vrot.lane.b32.xlu0 %v228, 119
    %v658 = vpop.permute.xlu0 %657
    %659 = vrot.lane.b32.xlu0 %v232, 119
    %v660 = vpop.permute.xlu0 %659
    %661 = vrot.lane.b32.xlu0 %v236, 119
    %v662 = vpop.permute.xlu0 %661
    %663 = vrot.lane.b32.xlu0 %v240, 119
    %v664 = vpop.permute.xlu0 %663
    %vm665 = vcmask 973824
    %v666 = vsel %vm665, %v634, %v636
    %v667 = vsel %vm665, %v638, %v640
    %v668 = vsel %vm665, %v642, %v644
    %v669 = vsel %vm665, %v646, %v648
    %v670 = vsel %vm665, %v650, %v652
    %v671 = vsel %vm665, %v654, %v656
    %v672 = vsel %vm665, %v658, %v660
    %v673 = vsel %vm665, %v662, %v664
    %682 = vrot.lane.b32.xlu0 %v180, 118
    %v683 = vpop.permute.xlu0 %682
    %684 = vrot.lane.b32.xlu0 %v184, 118
    %v685 = vpop.permute.xlu0 %684
    %686 = vrot.lane.b32.xlu0 %v188, 118
    %v687 = vpop.permute.xlu0 %686
    %688 = vrot.lane.b32.xlu0 %v192, 118
    %v689 = vpop.permute.xlu0 %688
    %690 = vrot.lane.b32.xlu0 %v196, 118
    %v691 = vpop.permute.xlu0 %690
    %692 = vrot.lane.b32.xlu0 %v200, 118
    %v693 = vpop.permute.xlu0 %692
    %694 = vrot.lane.b32.xlu0 %v204, 118
    %v695 = vpop.permute.xlu0 %694
    %696 = vrot.lane.b32.xlu0 %v208, 118
    %v697 = vpop.permute.xlu0 %696
    %698 = vrot.lane.b32.xlu0 %v212, 118
    %v699 = vpop.permute.xlu0 %698
    %700 = vrot.lane.b32.xlu0 %v216, 118
    %v701 = vpop.permute.xlu0 %700
    %702 = vrot.lane.b32.xlu0 %v220, 118
    %v703 = vpop.permute.xlu0 %702
    %704 = vrot.lane.b32.xlu0 %v224, 118
    %v705 = vpop.permute.xlu0 %704
    %706 = vrot.lane.b32.xlu0 %v228, 118
    %v707 = vpop.permute.xlu0 %706
    %708 = vrot.lane.b32.xlu0 %v232, 118
    %v709 = vpop.permute.xlu0 %708
    %710 = vrot.lane.b32.xlu0 %v236, 118
    %v711 = vpop.permute.xlu0 %710
    %712 = vrot.lane.b32.xlu0 %v240, 118
    %v713 = vpop.permute.xlu0 %712
    %vm714 = vcmask 965632
    %v715 = vsel %vm714, %v683, %v685
    %v716 = vsel %vm714, %v687, %v689
    %v717 = vsel %vm714, %v691, %v693
    %v718 = vsel %vm714, %v695, %v697
    %v719 = vsel %vm714, %v699, %v701
    %v720 = vsel %vm714, %v703, %v705
    %v721 = vsel %vm714, %v707, %v709
    %v722 = vsel %vm714, %v711, %v713
    %731 = vrot.lane.b32.xlu0 %v180, 117
    %v732 = vpop.permute.xlu0 %731
    %733 = vrot.lane.b32.xlu0 %v184, 117
    %v734 = vpop.permute.xlu0 %733
    %735 = vrot.lane.b32.xlu0 %v188, 117
    %v736 = vpop.permute.xlu0 %735
    %737 = vrot.lane.b32.xlu0 %v192, 117
    %v738 = vpop.permute.xlu0 %737
    %739 = vrot.lane.b32.xlu0 %v196, 117
    %v740 = vpop.permute.xlu0 %739
    %741 = vrot.lane.b32.xlu0 %v200, 117
    %v742 = vpop.permute.xlu0 %741
    %743 = vrot.lane.b32.xlu0 %v204, 117
    %v744 = vpop.permute.xlu0 %743
    %745 = vrot.lane.b32.xlu0 %v208, 117
    %v746 = vpop.permute.xlu0 %745
    %747 = vrot.lane.b32.xlu0 %v212, 117
    %v748 = vpop.permute.xlu0 %747
    %749 = vrot.lane.b32.xlu0 %v216, 117
    %v750 = vpop.permute.xlu0 %749
    %751 = vrot.lane.b32.xlu0 %v220, 117
    %v752 = vpop.permute.xlu0 %751
    %753 = vrot.lane.b32.xlu0 %v224, 117
    %v754 = vpop.permute.xlu0 %753
    %755 = vrot.lane.b32.xlu0 %v228, 117
    %v756 = vpop.permute.xlu0 %755
    %757 = vrot.lane.b32.xlu0 %v232, 117
    %v758 = vpop.permute.xlu0 %757
    %759 = vrot.lane.b32.xlu0 %v236, 117
    %v760 = vpop.permute.xlu0 %759
    %761 = vrot.lane.b32.xlu0 %v240, 117
    %v762 = vpop.permute.xlu0 %761
    %vm763 = vcmask 957440
    %v764 = vsel %vm763, %v732, %v734
    %v765 = vsel %vm763, %v736, %v738
    %v766 = vsel %vm763, %v740, %v742
    %v767 = vsel %vm763, %v744, %v746
    %v768 = vsel %vm763, %v748, %v750
    %v769 = vsel %vm763, %v752, %v754
    %v770 = vsel %vm763, %v756, %v758
    %v771 = vsel %vm763, %v760, %v762
    %780 = vrot.lane.b32.xlu0 %v180, 116
    %v781 = vpop.permute.xlu0 %780
    %782 = vrot.lane.b32.xlu0 %v184, 116
    %v783 = vpop.permute.xlu0 %782
    %784 = vrot.lane.b32.xlu0 %v188, 116
    %v785 = vpop.permute.xlu0 %784
    %786 = vrot.lane.b32.xlu0 %v192, 116
    %v787 = vpop.permute.xlu0 %786
    %788 = vrot.lane.b32.xlu0 %v196, 116
    %v789 = vpop.permute.xlu0 %788
    %790 = vrot.lane.b32.xlu0 %v200, 116
    %v791 = vpop.permute.xlu0 %790
    %792 = vrot.lane.b32.xlu0 %v204, 116
    %v793 = vpop.permute.xlu0 %792
    %794 = vrot.lane.b32.xlu0 %v208, 116
    %v795 = vpop.permute.xlu0 %794
    %796 = vrot.lane.b32.xlu0 %v212, 116
    %v797 = vpop.permute.xlu0 %796
    %798 = vrot.lane.b32.xlu0 %v216, 116
    %v799 = vpop.permute.xlu0 %798
    %800 = vrot.lane.b32.xlu0 %v220, 116
    %v801 = vpop.permute.xlu0 %800
    %802 = vrot.lane.b32.xlu0 %v224, 116
    %v803 = vpop.permute.xlu0 %802
    %804 = vrot.lane.b32.xlu0 %v228, 116
    %v805 = vpop.permute.xlu0 %804
    %806 = vrot.lane.b32.xlu0 %v232, 116
    %v807 = vpop.permute.xlu0 %806
    %808 = vrot.lane.b32.xlu0 %v236, 116
    %v809 = vpop.permute.xlu0 %808
    %810 = vrot.lane.b32.xlu0 %v240, 116
    %v811 = vpop.permute.xlu0 %810
    %vm812 = vcmask 949248
    %v813 = vsel %vm812, %v781, %v783
    %v814 = vsel %vm812, %v785, %v787
    %v815 = vsel %vm812, %v789, %v791
    %v816 = vsel %vm812, %v793, %v795
    %v817 = vsel %vm812, %v797, %v799
    %v818 = vsel %vm812, %v801, %v803
    %v819 = vsel %vm812, %v805, %v807
    %v820 = vsel %vm812, %v809, %v811
    %829 = vrot.lane.b32.xlu0 %v180, 115
    %v830 = vpop.permute.xlu0 %829
    %831 = vrot.lane.b32.xlu0 %v184, 115
    %v832 = vpop.permute.xlu0 %831
    %833 = vrot.lane.b32.xlu0 %v188, 115
    %v834 = vpop.permute.xlu0 %833
    %835 = vrot.lane.b32.xlu0 %v192, 115
    %v836 = vpop.permute.xlu0 %835
    %837 = vrot.lane.b32.xlu0 %v196, 115
    %v838 = vpop.permute.xlu0 %837
    %839 = vrot.lane.b32.xlu0 %v200, 115
    %v840 = vpop.permute.xlu0 %839
    %841 = vrot.lane.b32.xlu0 %v204, 115
    %v842 = vpop.permute.xlu0 %841
    %843 = vrot.lane.b32.xlu0 %v208, 115
    %v844 = vpop.permute.xlu0 %843
    %845 = vrot.lane.b32.xlu0 %v212, 115
    %v846 = vpop.permute.xlu0 %845
    %847 = vrot.lane.b32.xlu0 %v216, 115
    %v848 = vpop.permute.xlu0 %847
    %849 = vrot.lane.b32.xlu0 %v220, 115
    %v850 = vpop.permute.xlu0 %849
    %851 = vrot.lane.b32.xlu0 %v224, 115
    %v852 = vpop.permute.xlu0 %851
    %853 = vrot.lane.b32.xlu0 %v228, 115
    %v854 = vpop.permute.xlu0 %853
    %855 = vrot.lane.b32.xlu0 %v232, 115
    %v856 = vpop.permute.xlu0 %855
    %857 = vrot.lane.b32.xlu0 %v236, 115
    %v858 = vpop.permute.xlu0 %857
    %859 = vrot.lane.b32.xlu0 %v240, 115
    %v860 = vpop.permute.xlu0 %859
    %vm861 = vcmask 941056
    %v862 = vsel %vm861, %v830, %v832
    %v863 = vsel %vm861, %v834, %v836
    %v864 = vsel %vm861, %v838, %v840
    %v865 = vsel %vm861, %v842, %v844
    %v866 = vsel %vm861, %v846, %v848
    %v867 = vsel %vm861, %v850, %v852
    %v868 = vsel %vm861, %v854, %v856
    %v869 = vsel %vm861, %v858, %v860
    %878 = vrot.lane.b32.xlu0 %v180, 114
    %v879 = vpop.permute.xlu0 %878
    %880 = vrot.lane.b32.xlu0 %v184, 114
    %v881 = vpop.permute.xlu0 %880
    %882 = vrot.lane.b32.xlu0 %v188, 114
    %v883 = vpop.permute.xlu0 %882
    %884 = vrot.lane.b32.xlu0 %v192, 114
    %v885 = vpop.permute.xlu0 %884
    %886 = vrot.lane.b32.xlu0 %v196, 114
    %v887 = vpop.permute.xlu0 %886
    %888 = vrot.lane.b32.xlu0 %v200, 114
    %v889 = vpop.permute.xlu0 %888
    %890 = vrot.lane.b32.xlu0 %v204, 114
    %v891 = vpop.permute.xlu0 %890
    %892 = vrot.lane.b32.xlu0 %v208, 114
    %v893 = vpop.permute.xlu0 %892
    %894 = vrot.lane.b32.xlu0 %v212, 114
    %v895 = vpop.permute.xlu0 %894
    %896 = vrot.lane.b32.xlu0 %v216, 114
    %v897 = vpop.permute.xlu0 %896
    %898 = vrot.lane.b32.xlu0 %v220, 114
    %v899 = vpop.permute.xlu0 %898
    %900 = vrot.lane.b32.xlu0 %v224, 114
    %v901 = vpop.permute.xlu0 %900
    %902 = vrot.lane.b32.xlu0 %v228, 114
    %v903 = vpop.permute.xlu0 %902
    %904 = vrot.lane.b32.xlu0 %v232, 114
    %v905 = vpop.permute.xlu0 %904
    %906 = vrot.lane.b32.xlu0 %v236, 114
    %v907 = vpop.permute.xlu0 %906
    %908 = vrot.lane.b32.xlu0 %v240, 114
    %v909 = vpop.permute.xlu0 %908
    %vm910 = vcmask 932864
    %v911 = vsel %vm910, %v879, %v881
    %v912 = vsel %vm910, %v883, %v885
    %v913 = vsel %vm910, %v887, %v889
    %v914 = vsel %vm910, %v891, %v893
    %v915 = vsel %vm910, %v895, %v897
    %v916 = vsel %vm910, %v899, %v901
    %v917 = vsel %vm910, %v903, %v905
    %v918 = vsel %vm910, %v907, %v909
    %927 = vrot.lane.b32.xlu0 %v180, 113
    %v928 = vpop.permute.xlu0 %927
    %929 = vrot.lane.b32.xlu0 %v184, 113
    %v930 = vpop.permute.xlu0 %929
    %931 = vrot.lane.b32.xlu0 %v188, 113
    %v932 = vpop.permute.xlu0 %931
    %933 = vrot.lane.b32.xlu0 %v192, 113
    %v934 = vpop.permute.xlu0 %933
    %935 = vrot.lane.b32.xlu0 %v196, 113
    %v936 = vpop.permute.xlu0 %935
    %937 = vrot.lane.b32.xlu0 %v200, 113
    %v938 = vpop.permute.xlu0 %937
    %939 = vrot.lane.b32.xlu0 %v204, 113
    %v940 = vpop.permute.xlu0 %939
    %941 = vrot.lane.b32.xlu0 %v208, 113
    %v942 = vpop.permute.xlu0 %941
    %943 = vrot.lane.b32.xlu0 %v212, 113
    %v944 = vpop.permute.xlu0 %943
    %945 = vrot.lane.b32.xlu0 %v216, 113
    %v946 = vpop.permute.xlu0 %945
    %947 = vrot.lane.b32.xlu0 %v220, 113
    %v948 = vpop.permute.xlu0 %947
    %949 = vrot.lane.b32.xlu0 %v224, 113
    %v950 = vpop.permute.xlu0 %949
    %951 = vrot.lane.b32.xlu0 %v228, 113
    %v952 = vpop.permute.xlu0 %951
    %953 = vrot.lane.b32.xlu0 %v232, 113
    %v954 = vpop.permute.xlu0 %953
    %955 = vrot.lane.b32.xlu0 %v236, 113
    %v956 = vpop.permute.xlu0 %955
    %957 = vrot.lane.b32.xlu0 %v240, 113
    %v958 = vpop.permute.xlu0 %957
    %vm959 = vcmask 924672
    %v960 = vsel %vm959, %v928, %v930
    %v961 = vsel %vm959, %v932, %v934
    %v962 = vsel %vm959, %v936, %v938
    %v963 = vsel %vm959, %v940, %v942
    %v964 = vsel %vm959, %v944, %v946
    %v965 = vsel %vm959, %v948, %v950
    %v966 = vsel %vm959, %v952, %v954
    %v967 = vsel %vm959, %v956, %v958
    %vm976 = vcmask 1040384
    %v977 = vsel %vm976, %v92, %v274
    %v978 = vsel %vm976, %v106, %v275
    %v979 = vsel %vm976, %v114, %v276
    %v980 = vsel %vm976, %v116, %v277
    %v981 = vsel %vm976, %v99, %v278
    %v982 = vsel %vm976, %v113, %v279
    %v983 = vsel %vm976, %v115, %v280
    %v984 = vsel %vm976, %v117, %v281
    %vm985 = vcmask 1041408
    %v986 = vsel %vm985, %v977, %v323
    %v987 = vsel %vm985, %v978, %v324
    %v988 = vsel %vm985, %v979, %v325
    %v989 = vsel %vm985, %v980, %v326
    %v990 = vsel %vm985, %v981, %v327
    %v991 = vsel %vm985, %v982, %v328
    %v992 = vsel %vm985, %v983, %v329
    %v993 = vsel %vm985, %v984, %v330
    %vm994 = vcmask 1042432
    %v995 = vsel %vm994, %v986, %v372
    %v996 = vsel %vm994, %v987, %v373
    %v997 = vsel %vm994, %v988, %v374
    %v998 = vsel %vm994, %v989, %v375
    %v999 = vsel %vm994, %v990, %v376
    %v1000 = vsel %vm994, %v991, %v377
    %v1001 = vsel %vm994, %v992, %v378
    %v1002 = vsel %vm994, %v993, %v379
    %vm1003 = vcmask 1043456
    %v1004 = vsel %vm1003, %v995, %v421
    %v1005 = vsel %vm1003, %v996, %v422
    %v1006 = vsel %vm1003, %v997, %v423
    %v1007 = vsel %vm1003, %v998, %v424
    %v1008 = vsel %vm1003, %v999, %v425
    %v1009 = vsel %vm1003, %v1000, %v426
    %v1010 = vsel %vm1003, %v1001, %v427
    %v1011 = vsel %vm1003, %v1002, %v428
    %vm1012 = vcmask 1044480
    %v1013 = vsel %vm1012, %v1004, %v470
    %v1014 = vsel %vm1012, %v1005, %v471
    %v1015 = vsel %vm1012, %v1006, %v472
    %v1016 = vsel %vm1012, %v1007, %v473
    %v1017 = vsel %vm1012, %v1008, %v474
    %v1018 = vsel %vm1012, %v1009, %v475
    %v1019 = vsel %vm1012, %v1010, %v476
    %v1020 = vsel %vm1012, %v1011, %v477
    %vm1021 = vcmask 1045504
    %v1022 = vsel %vm1021, %v1013, %v519
    %v1023 = vsel %vm1021, %v1014, %v520
    %v1024 = vsel %vm1021, %v1015, %v521
    %v1025 = vsel %vm1021, %v1016, %v522
    %v1026 = vsel %vm1021, %v1017, %v523
    %v1027 = vsel %vm1021, %v1018, %v524
    %v1028 = vsel %vm1021, %v1019, %v525
    %v1029 = vsel %vm1021, %v1020, %v526
    %vm1030 = vcmask 1046528
    %v1031 = vsel %vm1030, %v1022, %v568
    %v1032 = vsel %vm1030, %v1023, %v569
    %v1033 = vsel %vm1030, %v1024, %v570
    %v1034 = vsel %vm1030, %v1025, %v571
    %v1035 = vsel %vm1030, %v1026, %v572
    %v1036 = vsel %vm1030, %v1027, %v573
    %v1037 = vsel %vm1030, %v1028, %v574
    %v1038 = vsel %vm1030, %v1029, %v575
    %v1039 = vsel %vm976, %v617, %v666
    %v1040 = vsel %vm976, %v618, %v667
    %v1041 = vsel %vm976, %v619, %v668
    %v1042 = vsel %vm976, %v620, %v669
    %v1043 = vsel %vm976, %v621, %v670
    %v1044 = vsel %vm976, %v622, %v671
    %v1045 = vsel %vm976, %v623, %v672
    %v1046 = vsel %vm976, %v624, %v673
    %v1047 = vsel %vm985, %v1039, %v715
    %v1048 = vsel %vm985, %v1040, %v716
    %v1049 = vsel %vm985, %v1041, %v717
    %v1050 = vsel %vm985, %v1042, %v718
    %v1051 = vsel %vm985, %v1043, %v719
    %v1052 = vsel %vm985, %v1044, %v720
    %v1053 = vsel %vm985, %v1045, %v721
    %v1054 = vsel %vm985, %v1046, %v722
    %v1055 = vsel %vm994, %v1047, %v764
    %v1056 = vsel %vm994, %v1048, %v765
    %v1057 = vsel %vm994, %v1049, %v766
    %v1058 = vsel %vm994, %v1050, %v767
    %v1059 = vsel %vm994, %v1051, %v768
    %v1060 = vsel %vm994, %v1052, %v769
    %v1061 = vsel %vm994, %v1053, %v770
    %v1062 = vsel %vm994, %v1054, %v771
    %v1063 = vsel %vm1003, %v1055, %v813
    %v1064 = vsel %vm1003, %v1056, %v814
    %v1065 = vsel %vm1003, %v1057, %v815
    %v1066 = vsel %vm1003, %v1058, %v816
    %v1067 = vsel %vm1003, %v1059, %v817
    %v1068 = vsel %vm1003, %v1060, %v818
    %v1069 = vsel %vm1003, %v1061, %v819
    %v1070 = vsel %vm1003, %v1062, %v820
    %v1071 = vsel %vm1012, %v1063, %v862
    %v1072 = vsel %vm1012, %v1064, %v863
    %v1073 = vsel %vm1012, %v1065, %v864
    %v1074 = vsel %vm1012, %v1066, %v865
    %v1075 = vsel %vm1012, %v1067, %v866
    %v1076 = vsel %vm1012, %v1068, %v867
    %v1077 = vsel %vm1012, %v1069, %v868
    %v1078 = vsel %vm1012, %v1070, %v869
    %v1079 = vsel %vm1021, %v1071, %v911
    %v1080 = vsel %vm1021, %v1072, %v912
    %v1081 = vsel %vm1021, %v1073, %v913
    %v1082 = vsel %vm1021, %v1074, %v914
    %v1083 = vsel %vm1021, %v1075, %v915
    %v1084 = vsel %vm1021, %v1076, %v916
    %v1085 = vsel %vm1021, %v1077, %v917
    %v1086 = vsel %vm1021, %v1078, %v918
    %v1087 = vsel %vm1030, %v1079, %v960
    %v1088 = vsel %vm1030, %v1080, %v961
    %v1089 = vsel %vm1030, %v1081, %v962
    %v1090 = vsel %vm1030, %v1082, %v963
    %v1091 = vsel %vm1030, %v1083, %v964
    %v1092 = vsel %vm1030, %v1084, %v965
    %v1093 = vsel %vm1030, %v1085, %v966
    %v1094 = vsel %vm1030, %v1086, %v967
    %v1231 = vsel %vm976, %v180, %v274
    %v1232 = vsel %vm976, %v184, %v244
    %v1233 = vsel %vm976, %v188, %v275
    %v1234 = vsel %vm976, %v192, %v248
    %v1235 = vsel %vm976, %v196, %v276
    %v1236 = vsel %vm976, %v200, %v252
    %v1237 = vsel %vm976, %v204, %v277
    %v1238 = vsel %vm976, %v208, %v256
    %v1239 = vsel %vm976, %v212, %v278
    %v1240 = vsel %vm976, %v216, %v260
    %v1241 = vsel %vm976, %v220, %v279
    %v1242 = vsel %vm976, %v224, %v264
    %v1243 = vsel %vm976, %v228, %v280
    %v1244 = vsel %vm976, %v232, %v268
    %v1245 = vsel %vm976, %v236, %v281
    %v1246 = vsel %vm976, %v240, %v272
    %v1247 = vsel %vm985, %v1231, %v323
    %v1248 = vsel %vm985, %v1232, %v293
    %v1249 = vsel %vm985, %v1233, %v324
    %v1250 = vsel %vm985, %v1234, %v297
    %v1251 = vsel %vm985, %v1235, %v325
    %v1252 = vsel %vm985, %v1236, %v301
    %v1253 = vsel %vm985, %v1237, %v326
    %v1254 = vsel %vm985, %v1238, %v305
    %v1255 = vsel %vm985, %v1239, %v327
    %v1256 = vsel %vm985, %v1240, %v309
    %v1257 = vsel %vm985, %v1241, %v328
    %v1258 = vsel %vm985, %v1242, %v313
    %v1259 = vsel %vm985, %v1243, %v329
    %v1260 = vsel %vm985, %v1244, %v317
    %v1261 = vsel %vm985, %v1245, %v330
    %v1262 = vsel %vm985, %v1246, %v321
    %v1263 = vsel %vm994, %v1247, %v372
    %v1264 = vsel %vm994, %v1248, %v342
    %v1265 = vsel %vm994, %v1249, %v373
    %v1266 = vsel %vm994, %v1250, %v346
    %v1267 = vsel %vm994, %v1251, %v374
    %v1268 = vsel %vm994, %v1252, %v350
    %v1269 = vsel %vm994, %v1253, %v375
    %v1270 = vsel %vm994, %v1254, %v354
    %v1271 = vsel %vm994, %v1255, %v376
    %v1272 = vsel %vm994, %v1256, %v358
    %v1273 = vsel %vm994, %v1257, %v377
    %v1274 = vsel %vm994, %v1258, %v362
    %v1275 = vsel %vm994, %v1259, %v378
    %v1276 = vsel %vm994, %v1260, %v366
    %v1277 = vsel %vm994, %v1261, %v379
    %v1278 = vsel %vm994, %v1262, %v370
    %v1279 = vsel %vm1003, %v1263, %v421
    %v1280 = vsel %vm1003, %v1264, %v391
    %v1281 = vsel %vm1003, %v1265, %v422
    %v1282 = vsel %vm1003, %v1266, %v395
    %v1283 = vsel %vm1003, %v1267, %v423
    %v1284 = vsel %vm1003, %v1268, %v399
    %v1285 = vsel %vm1003, %v1269, %v424
    %v1286 = vsel %vm1003, %v1270, %v403
    %v1287 = vsel %vm1003, %v1271, %v425
    %v1288 = vsel %vm1003, %v1272, %v407
    %v1289 = vsel %vm1003, %v1273, %v426
    %v1290 = vsel %vm1003, %v1274, %v411
    %v1291 = vsel %vm1003, %v1275, %v427
    %v1292 = vsel %vm1003, %v1276, %v415
    %v1293 = vsel %vm1003, %v1277, %v428
    %v1294 = vsel %vm1003, %v1278, %v419
    %v1295 = vsel %vm1012, %v1279, %v470
    %v1296 = vsel %vm1012, %v1280, %v440
    %v1297 = vsel %vm1012, %v1281, %v471
    %v1298 = vsel %vm1012, %v1282, %v444
    %v1299 = vsel %vm1012, %v1283, %v472
    %v1300 = vsel %vm1012, %v1284, %v448
    %v1301 = vsel %vm1012, %v1285, %v473
    %v1302 = vsel %vm1012, %v1286, %v452
    %v1303 = vsel %vm1012, %v1287, %v474
    %v1304 = vsel %vm1012, %v1288, %v456
    %v1305 = vsel %vm1012, %v1289, %v475
    %v1306 = vsel %vm1012, %v1290, %v460
    %v1307 = vsel %vm1012, %v1291, %v476
    %v1308 = vsel %vm1012, %v1292, %v464
    %v1309 = vsel %vm1012, %v1293, %v477
    %v1310 = vsel %vm1012, %v1294, %v468
    %v1311 = vsel %vm1021, %v1295, %v519
    %v1312 = vsel %vm1021, %v1296, %v489
    %v1313 = vsel %vm1021, %v1297, %v520
    %v1314 = vsel %vm1021, %v1298, %v493
    %v1315 = vsel %vm1021, %v1299, %v521
    %v1316 = vsel %vm1021, %v1300, %v497
    %v1317 = vsel %vm1021, %v1301, %v522
    %v1318 = vsel %vm1021, %v1302, %v501
    %v1319 = vsel %vm1021, %v1303, %v523
    %v1320 = vsel %vm1021, %v1304, %v505
    %v1321 = vsel %vm1021, %v1305, %v524
    %v1322 = vsel %vm1021, %v1306, %v509
    %v1323 = vsel %vm1021, %v1307, %v525
    %v1324 = vsel %vm1021, %v1308, %v513
    %v1325 = vsel %vm1021, %v1309, %v526
    %v1326 = vsel %vm1021, %v1310, %v517
    %v1327 = vsel %vm1030, %v1311, %v568
    %v1328 = vsel %vm1030, %v1312, %v538
    %v1329 = vsel %vm1030, %v1313, %v569
    %v1330 = vsel %vm1030, %v1314, %v542
    %v1331 = vsel %vm1030, %v1315, %v570
    %v1332 = vsel %vm1030, %v1316, %v546
    %v1333 = vsel %vm1030, %v1317, %v571
    %v1334 = vsel %vm1030, %v1318, %v550
    %v1335 = vsel %vm1030, %v1319, %v572
    %v1336 = vsel %vm1030, %v1320, %v554
    %v1337 = vsel %vm1030, %v1321, %v573
    %v1338 = vsel %vm1030, %v1322, %v558
    %v1339 = vsel %vm1030, %v1323, %v574
    %v1340 = vsel %vm1030, %v1324, %v562
    %v1341 = vsel %vm1030, %v1325, %v575
    %v1342 = vsel %vm1030, %v1326, %v566
    %v1343 = vsel %vm976, %v587, %v636
    %v1344 = vsel %vm976, %v591, %v640
    %v1345 = vsel %vm976, %v595, %v644
    %v1346 = vsel %vm976, %v599, %v648
    %v1347 = vsel %vm976, %v603, %v652
    %v1348 = vsel %vm976, %v607, %v656
    %v1349 = vsel %vm976, %v611, %v660
    %v1350 = vsel %vm976, %v615, %v664
    %v1351 = vsel %vm985, %v1343, %v685
    %v1352 = vsel %vm985, %v1344, %v689
    %v1353 = vsel %vm985, %v1345, %v693
    %v1354 = vsel %vm985, %v1346, %v697
    %v1355 = vsel %vm985, %v1347, %v701
    %v1356 = vsel %vm985, %v1348, %v705
    %v1357 = vsel %vm985, %v1349, %v709
    %v1358 = vsel %vm985, %v1350, %v713
    %v1359 = vsel %vm994, %v1351, %v734
    %v1360 = vsel %vm994, %v1352, %v738
    %v1361 = vsel %vm994, %v1353, %v742
    %v1362 = vsel %vm994, %v1354, %v746
    %v1363 = vsel %vm994, %v1355, %v750
    %v1364 = vsel %vm994, %v1356, %v754
    %v1365 = vsel %vm994, %v1357, %v758
    %v1366 = vsel %vm994, %v1358, %v762
    %v1367 = vsel %vm1003, %v1359, %v783
    %v1368 = vsel %vm1003, %v1360, %v787
    %v1369 = vsel %vm1003, %v1361, %v791
    %v1370 = vsel %vm1003, %v1362, %v795
    %v1371 = vsel %vm1003, %v1363, %v799
    %v1372 = vsel %vm1003, %v1364, %v803
    %v1373 = vsel %vm1003, %v1365, %v807
    %v1374 = vsel %vm1003, %v1366, %v811
    %v1375 = vsel %vm1012, %v1367, %v832
    %v1376 = vsel %vm1012, %v1368, %v836
    %v1377 = vsel %vm1012, %v1369, %v840
    %v1378 = vsel %vm1012, %v1370, %v844
    %v1379 = vsel %vm1012, %v1371, %v848
    %v1380 = vsel %vm1012, %v1372, %v852
    %v1381 = vsel %vm1012, %v1373, %v856
    %v1382 = vsel %vm1012, %v1374, %v860
    %v1383 = vsel %vm1021, %v1375, %v881
    %v1384 = vsel %vm1021, %v1376, %v885
    %v1385 = vsel %vm1021, %v1377, %v889
    %v1386 = vsel %vm1021, %v1378, %v893
    %v1387 = vsel %vm1021, %v1379, %v897
    %v1388 = vsel %vm1021, %v1380, %v901
    %v1389 = vsel %vm1021, %v1381, %v905
    %v1390 = vsel %vm1021, %v1382, %v909
    %v1391 = vsel %vm1030, %v1383, %v930
    %v1392 = vsel %vm1030, %v1384, %v934
    %v1393 = vsel %vm1030, %v1385, %v938
    %v1394 = vsel %vm1030, %v1386, %v942
    %v1395 = vsel %vm1030, %v1387, %v946
    %v1396 = vsel %vm1030, %v1388, %v950
    %v1397 = vsel %vm1030, %v1389, %v954
    %v1398 = vsel %vm1030, %v1390, %v958
    %1431 = vrot.lane.b32.xlu0 %v1327, 112
    %v1432 = vpop.permute.xlu0 %1431
    %1433 = vrot.lane.b32.xlu0 %v1328, 112
    %v1434 = vpop.permute.xlu0 %1433
    %1435 = vrot.lane.b32.xlu0 %v1087, 112
    %v1436 = vpop.permute.xlu0 %1435
    %1437 = vrot.lane.b32.xlu0 %v1391, 112
    %v1438 = vpop.permute.xlu0 %1437
    %1439 = vrot.lane.b32.xlu0 %v1329, 112
    %v1440 = vpop.permute.xlu0 %1439
    %1441 = vrot.lane.b32.xlu0 %v1330, 112
    %v1442 = vpop.permute.xlu0 %1441
    %1443 = vrot.lane.b32.xlu0 %v1088, 112
    %v1444 = vpop.permute.xlu0 %1443
    %1445 = vrot.lane.b32.xlu0 %v1392, 112
    %v1446 = vpop.permute.xlu0 %1445
    %1447 = vrot.lane.b32.xlu0 %v1331, 112
    %v1448 = vpop.permute.xlu0 %1447
    %1449 = vrot.lane.b32.xlu0 %v1332, 112
    %v1450 = vpop.permute.xlu0 %1449
    %1451 = vrot.lane.b32.xlu0 %v1089, 112
    %v1452 = vpop.permute.xlu0 %1451
    %1453 = vrot.lane.b32.xlu0 %v1393, 112
    %v1454 = vpop.permute.xlu0 %1453
    %1455 = vrot.lane.b32.xlu0 %v1333, 112
    %v1456 = vpop.permute.xlu0 %1455
    %1457 = vrot.lane.b32.xlu0 %v1334, 112
    %v1458 = vpop.permute.xlu0 %1457
    %1459 = vrot.lane.b32.xlu0 %v1090, 112
    %v1460 = vpop.permute.xlu0 %1459
    %1461 = vrot.lane.b32.xlu0 %v1394, 112
    %v1462 = vpop.permute.xlu0 %1461
    %1463 = vrot.lane.b32.xlu0 %v1335, 112
    %v1464 = vpop.permute.xlu0 %1463
    %1465 = vrot.lane.b32.xlu0 %v1336, 112
    %v1466 = vpop.permute.xlu0 %1465
    %1467 = vrot.lane.b32.xlu0 %v1091, 112
    %v1468 = vpop.permute.xlu0 %1467
    %1469 = vrot.lane.b32.xlu0 %v1395, 112
    %v1470 = vpop.permute.xlu0 %1469
    %1471 = vrot.lane.b32.xlu0 %v1337, 112
    %v1472 = vpop.permute.xlu0 %1471
    %1473 = vrot.lane.b32.xlu0 %v1338, 112
    %v1474 = vpop.permute.xlu0 %1473
    %1475 = vrot.lane.b32.xlu0 %v1092, 112
    %v1476 = vpop.permute.xlu0 %1475
    %1477 = vrot.lane.b32.xlu0 %v1396, 112
    %v1478 = vpop.permute.xlu0 %1477
    %1479 = vrot.lane.b32.xlu0 %v1339, 112
    %v1480 = vpop.permute.xlu0 %1479
    %1481 = vrot.lane.b32.xlu0 %v1340, 112
    %v1482 = vpop.permute.xlu0 %1481
    %1483 = vrot.lane.b32.xlu0 %v1093, 112
    %v1484 = vpop.permute.xlu0 %1483
    %1485 = vrot.lane.b32.xlu0 %v1397, 112
    %v1486 = vpop.permute.xlu0 %1485
    %1487 = vrot.lane.b32.xlu0 %v1341, 112
    %v1488 = vpop.permute.xlu0 %1487
    %1489 = vrot.lane.b32.xlu0 %v1342, 112
    %v1490 = vpop.permute.xlu0 %1489
    %1491 = vrot.lane.b32.xlu0 %v1094, 112
    %v1492 = vpop.permute.xlu0 %1491
    %1493 = vrot.lane.b32.xlu0 %v1398, 112
    %v1494 = vpop.permute.xlu0 %1493
    %vm1495 = vcmask 916480
    %v1496 = vsel %vm1495, %v1432, %v1434
    %v1497 = vsel %vm1495, %v1436, %v1438
    %v1498 = vsel %vm1495, %v1440, %v1442
    %v1499 = vsel %vm1495, %v1444, %v1446
    %v1500 = vsel %vm1495, %v1448, %v1450
    %v1501 = vsel %vm1495, %v1452, %v1454
    %v1502 = vsel %vm1495, %v1456, %v1458
    %v1503 = vsel %vm1495, %v1460, %v1462
    %v1504 = vsel %vm1495, %v1464, %v1466
    %v1505 = vsel %vm1495, %v1468, %v1470
    %v1506 = vsel %vm1495, %v1472, %v1474
    %v1507 = vsel %vm1495, %v1476, %v1478
    %v1508 = vsel %vm1495, %v1480, %v1482
    %v1509 = vsel %vm1495, %v1484, %v1486
    %v1510 = vsel %vm1495, %v1488, %v1490
    %v1511 = vsel %vm1495, %v1492, %v1494
    %v1528 = vld [vmem:[%s2] sm:$0xf]
    %v1529 = vld [vmem:[%s2 + $0x4] sm:$0xf]
    %v1530 = vld [vmem:[%s2 + $0x8] sm:$0xf]
    %v1531 = vld [vmem:[%s2 + $0xc] sm:$0xf]
    %v1532 = vpack.c.bf16 %v1087, %v1031
    %v1533 = vpack.c.bf16 %v1497, %v1496
    %v1534 = vpack.c.bf16 %v1088, %v1032
    %v1535 = vpack.c.bf16 %v1499, %v1498
    %v1536 = vpack.c.bf16 %v1089, %v1033
    %v1537 = vpack.c.bf16 %v1501, %v1500
    %v1538 = vpack.c.bf16 %v1090, %v1034
    %v1539 = vpack.c.bf16 %v1503, %v1502
    %v1540 = vpack.c.bf16 %v1091, %v1035
    %v1541 = vpack.c.bf16 %v1505, %v1504
    %v1542 = vpack.c.bf16 %v1092, %v1036
    %v1543 = vpack.c.bf16 %v1507, %v1506
    %v1544 = vpack.c.bf16 %v1093, %v1037
    %v1545 = vpack.c.bf16 %v1509, %v1508
    %v1546 = vpack.c.bf16 %v1094, %v1038
    %v1547 = vpack.c.bf16 %v1511, %v1510
    %v1552 = vunpack.c.l.b16 %v1528
    %v1553 = vunpack.c.l.b16 %v1529
    %v1554 = vunpack.c.l.b16 %v1530
    %v1555 = vunpack.c.l.b16 %v1531
    %v1556 = vpack.c.b16 %v1553, %v1552
    %v1557 = vpack.c.b16 %v1555, %v1554
    %vm1558 = vcmask 261120
    %v1560 = vsel %vm1558, %v1556, 0
    %v1563 = vsel %vm1558, %v1557, 0
    %1565 = vmatprep.subr.bf16.mxu0 0
    %1566 = vmatpush1.bf16.msra.mxu0 0
    %1567 = vmatprep.subr.bf16.mxu0 0
    %1568 = vmatpush1.bf16.msra.mxu0 0
    %1569 = vmatprep.subr.bf16.mxu0 0
    %1570 = vmatpush1.bf16.msra.mxu0 0
    %1571 = vmatprep.subr.bf16.mxu0 0
    %1572 = vmatpush1.bf16.msra.mxu0 0
    %1573 = vmatprep.subr.bf16.mxu0 0
    %1574 = vmatpush1.bf16.msra.mxu0 0
    %1575 = vmatprep.subr.bf16.mxu0 0
    %1576 = vmatpush1.bf16.msra.mxu0 0
    %1577 = vmatprep.subr.bf16.mxu0 0
    %1578 = vmatpush1.bf16.msra.mxu0 %v1533
    %1579 = vmatprep.subr.bf16.mxu0 0
    %1580 = vmatpush1.bf16.msra.mxu0 %v1532
    %1581 = vmatprep.subr.bf16.mxu0 0
    %1582 = vmatpush2.bf16.msra.mxu0 0
    %1583 = vmatprep.subr.bf16.mxu0 0
    %1584 = vmatpush2.bf16.msra.mxu0 0
    %1585 = vmatprep.subr.bf16.mxu0 0
    %1586 = vmatpush2.bf16.msra.mxu0 0
    %1587 = vmatprep.subr.bf16.mxu0 0
    %1588 = vmatpush2.bf16.msra.mxu0 0
    %1589 = vmatprep.subr.bf16.mxu0 0
    %1590 = vmatpush2.bf16.msra.mxu0 0
    %1591 = vmatprep.subr.bf16.mxu0 0
    %1592 = vmatpush2.bf16.msra.mxu0 0
    %1593 = vmatprep.subr.bf16.mxu0 0
    %1594 = vmatpush2.bf16.msra.mxu0 0
    %1595 = vmatprep.subr.bf16.mxu0 0
    %1596 = vmatpush2.bf16.msra.mxu0 0
    %1597 = vmatprep.mubr.bf16.mxu0 0
    %1598 = vmatmul.mubr.bf16.gmra.mxu0 %v1560
    %v1599 = vpop.f32.mrf.mxu0
    %v1600 = vadd.f32 0.0, %v1599
    %v1601 = vpop.f32.mrf.mxu0
    %v1602 = vpop.f32.mrf.mxu0
    %v1603 = vadd.f32 0.0, %v1602
    %v1604 = vpop.f32.mrf.mxu0
    %1605 = vmatprep.mubr.bf16.mxu0 0
    %1606 = vmatmul.mubr.bf16.gmra.mxu0 %v1563
    %v1607 = vpop.f32.mrf.mxu0
    %v1608 = vadd.f32 0.0, %v1607
    %v1609 = vpop.f32.mrf.mxu0
    %v1610 = vpop.f32.mrf.mxu0
    %v1611 = vadd.f32 0.0, %v1610
    %v1612 = vpop.f32.mrf.mxu0
    %1613 = vdwg.mxu0
    %1614 = vmatprep.subr.bf16.mxu0 0
    %1615 = vmatpush1.bf16.msra.mxu0 0
    %1616 = vmatprep.subr.bf16.mxu0 0
    %1617 = vmatpush1.bf16.msra.mxu0 0
    %1618 = vmatprep.subr.bf16.mxu0 0
    %1619 = vmatpush1.bf16.msra.mxu0 0
    %1620 = vmatprep.subr.bf16.mxu0 0
    %1621 = vmatpush1.bf16.msra.mxu0 0
    %1622 = vmatprep.subr.bf16.mxu0 0
    %1623 = vmatpush1.bf16.msra.mxu0 0
    %1624 = vmatprep.subr.bf16.mxu0 0
    %1625 = vmatpush1.bf16.msra.mxu0 0
    %1626 = vmatprep.subr.bf16.mxu0 0
    %1627 = vmatpush1.bf16.msra.mxu0 %v1535
    %1628 = vmatprep.subr.bf16.mxu0 0
    %1629 = vmatpush1.bf16.msra.mxu0 %v1534
    %1630 = vmatprep.subr.bf16.mxu0 0
    %1631 = vmatpush2.bf16.msra.mxu0 0
    %1632 = vmatprep.subr.bf16.mxu0 0
    %1633 = vmatpush2.bf16.msra.mxu0 0
    %1634 = vmatprep.subr.bf16.mxu0 0
    %1635 = vmatpush2.bf16.msra.mxu0 0
    %1636 = vmatprep.subr.bf16.mxu0 0
    %1637 = vmatpush2.bf16.msra.mxu0 0
    %1638 = vmatprep.subr.bf16.mxu0 0
    %1639 = vmatpush2.bf16.msra.mxu0 0
    %1640 = vmatprep.subr.bf16.mxu0 0
    %1641 = vmatpush2.bf16.msra.mxu0 0
    %1642 = vmatprep.subr.bf16.mxu0 0
    %1643 = vmatpush2.bf16.msra.mxu0 0
    %1644 = vmatprep.subr.bf16.mxu0 0
    %1645 = vmatpush2.bf16.msra.mxu0 0
    %1646 = vmatprep.mubr.bf16.mxu0 0
    %1647 = vmatmul.mubr.bf16.gmra.mxu0 %v1560
    %v1648 = vpop.f32.mrf.mxu0
    %v1649 = vadd.f32 0.0, %v1648
    %v1650 = vpop.f32.mrf.mxu0
    %v1651 = vpop.f32.mrf.mxu0
    %v1652 = vadd.f32 0.0, %v1651
    %v1653 = vpop.f32.mrf.mxu0
    %1654 = vmatprep.mubr.bf16.mxu0 0
    %1655 = vmatmul.mubr.bf16.gmra.mxu0 %v1563
    %v1656 = vpop.f32.mrf.mxu0
    %v1657 = vadd.f32 0.0, %v1656
    %v1658 = vpop.f32.mrf.mxu0
    %v1659 = vpop.f32.mrf.mxu0
    %v1660 = vadd.f32 0.0, %v1659
    %v1661 = vpop.f32.mrf.mxu0
    %1662 = vdwg.mxu0
    %1663 = vmatprep.subr.bf16.mxu0 0
    %1664 = vmatpush1.bf16.msra.mxu0 0
    %1665 = vmatprep.subr.bf16.mxu0 0
    %1666 = vmatpush1.bf16.msra.mxu0 0
    %1667 = vmatprep.subr.bf16.mxu0 0
    %1668 = vmatpush1.bf16.msra.mxu0 0
    %1669 = vmatprep.subr.bf16.mxu0 0
    %1670 = vmatpush1.bf16.msra.mxu0 0
    %1671 = vmatprep.subr.bf16.mxu0 0
    %1672 = vmatpush1.bf16.msra.mxu0 0
    %1673 = vmatprep.subr.bf16.mxu0 0
    %1674 = vmatpush1.bf16.msra.mxu0 0
    %1675 = vmatprep.subr.bf16.mxu0 0
    %1676 = vmatpush1.bf16.msra.mxu0 %v1537
    %1677 = vmatprep.subr.bf16.mxu0 0
    %1678 = vmatpush1.bf16.msra.mxu0 %v1536
    %1679 = vmatprep.subr.bf16.mxu0 0
    %1680 = vmatpush2.bf16.msra.mxu0 0
    %1681 = vmatprep.subr.bf16.mxu0 0
    %1682 = vmatpush2.bf16.msra.mxu0 0
    %1683 = vmatprep.subr.bf16.mxu0 0
    %1684 = vmatpush2.bf16.msra.mxu0 0
    %1685 = vmatprep.subr.bf16.mxu0 0
    %1686 = vmatpush2.bf16.msra.mxu0 0
    %1687 = vmatprep.subr.bf16.mxu0 0
    %1688 = vmatpush2.bf16.msra.mxu0 0
    %1689 = vmatprep.subr.bf16.mxu0 0
    %1690 = vmatpush2.bf16.msra.mxu0 0
    %1691 = vmatprep.subr.bf16.mxu0 0
    %1692 = vmatpush2.bf16.msra.mxu0 0
    %1693 = vmatprep.subr.bf16.mxu0 0
    %1694 = vmatpush2.bf16.msra.mxu0 0
    %1695 = vmatprep.mubr.bf16.mxu0 0
    %1696 = vmatmul.mubr.bf16.gmra.mxu0 %v1560
    %v1697 = vpop.f32.mrf.mxu0
    %v1698 = vadd.f32 0.0, %v1697
    %v1699 = vpop.f32.mrf.mxu0
    %v1700 = vpop.f32.mrf.mxu0
    %v1701 = vadd.f32 0.0, %v1700
    %v1702 = vpop.f32.mrf.mxu0
    %1703 = vmatprep.mubr.bf16.mxu0 0
    %1704 = vmatmul.mubr.bf16.gmra.mxu0 %v1563
    %v1705 = vpop.f32.mrf.mxu0
    %v1706 = vadd.f32 0.0, %v1705
    %v1707 = vpop.f32.mrf.mxu0
    %v1708 = vpop.f32.mrf.mxu0
    %v1709 = vadd.f32 0.0, %v1708
    %v1710 = vpop.f32.mrf.mxu0
    %1711 = vdwg.mxu0
    %1712 = vmatprep.subr.bf16.mxu0 0
    %1713 = vmatpush1.bf16.msra.mxu0 0
    %1714 = vmatprep.subr.bf16.mxu0 0
    %1715 = vmatpush1.bf16.msra.mxu0 0
    %1716 = vmatprep.subr.bf16.mxu0 0
    %1717 = vmatpush1.bf16.msra.mxu0 0
    %1718 = vmatprep.subr.bf16.mxu0 0
    %1719 = vmatpush1.bf16.msra.mxu0 0
    %1720 = vmatprep.subr.bf16.mxu0 0
    %1721 = vmatpush1.bf16.msra.mxu0 0
    %1722 = vmatprep.subr.bf16.mxu0 0
    %1723 = vmatpush1.bf16.msra.mxu0 0
    %1724 = vmatprep.subr.bf16.mxu0 0
    %1725 = vmatpush1.bf16.msra.mxu0 %v1539
    %1726 = vmatprep.subr.bf16.mxu0 0
    %1727 = vmatpush1.bf16.msra.mxu0 %v1538
    %1728 = vmatprep.subr.bf16.mxu0 0
    %1729 = vmatpush2.bf16.msra.mxu0 0
    %1730 = vmatprep.subr.bf16.mxu0 0
    %1731 = vmatpush2.bf16.msra.mxu0 0
    %1732 = vmatprep.subr.bf16.mxu0 0
    %1733 = vmatpush2.bf16.msra.mxu0 0
    %1734 = vmatprep.subr.bf16.mxu0 0
    %1735 = vmatpush2.bf16.msra.mxu0 0
    %1736 = vmatprep.subr.bf16.mxu0 0
    %1737 = vmatpush2.bf16.msra.mxu0 0
    %1738 = vmatprep.subr.bf16.mxu0 0
    %1739 = vmatpush2.bf16.msra.mxu0 0
    %1740 = vmatprep.subr.bf16.mxu0 0
    %1741 = vmatpush2.bf16.msra.mxu0 0
    %1742 = vmatprep.subr.bf16.mxu0 0
    %1743 = vmatpush2.bf16.msra.mxu0 0
    %1744 = vmatprep.mubr.bf16.mxu0 0
    %1745 = vmatmul.mubr.bf16.gmra.mxu0 %v1560
    %v1746 = vpop.f32.mrf.mxu0
    %v1747 = vadd.f32 0.0, %v1746
    %v1748 = vpop.f32.mrf.mxu0
    %v1749 = vpop.f32.mrf.mxu0
    %v1750 = vadd.f32 0.0, %v1749
    %v1751 = vpop.f32.mrf.mxu0
    %1752 = vmatprep.mubr.bf16.mxu0 0
    %1753 = vmatmul.mubr.bf16.gmra.mxu0 %v1563
    %v1754 = vpop.f32.mrf.mxu0
    %v1755 = vadd.f32 0.0, %v1754
    %v1756 = vpop.f32.mrf.mxu0
    %v1757 = vpop.f32.mrf.mxu0
    %v1758 = vadd.f32 0.0, %v1757
    %v1759 = vpop.f32.mrf.mxu0
    %1760 = vdwg.mxu0
    %1761 = vmatprep.subr.bf16.mxu0 0
    %1762 = vmatpush1.bf16.msra.mxu0 0
    %1763 = vmatprep.subr.bf16.mxu0 0
    %1764 = vmatpush1.bf16.msra.mxu0 0
    %1765 = vmatprep.subr.bf16.mxu0 0
    %1766 = vmatpush1.bf16.msra.mxu0 0
    %1767 = vmatprep.subr.bf16.mxu0 0
    %1768 = vmatpush1.bf16.msra.mxu0 0
    %1769 = vmatprep.subr.bf16.mxu0 0
    %1770 = vmatpush1.bf16.msra.mxu0 0
    %1771 = vmatprep.subr.bf16.mxu0 0
    %1772 = vmatpush1.bf16.msra.mxu0 0
    %1773 = vmatprep.subr.bf16.mxu0 0
    %1774 = vmatpush1.bf16.msra.mxu0 %v1541
    %1775 = vmatprep.subr.bf16.mxu0 0
    %1776 = vmatpush1.bf16.msra.mxu0 %v1540
    %1777 = vmatprep.subr.bf16.mxu0 0
    %1778 = vmatpush2.bf16.msra.mxu0 0
    %1779 = vmatprep.subr.bf16.mxu0 0
    %1780 = vmatpush2.bf16.msra.mxu0 0
    %1781 = vmatprep.subr.bf16.mxu0 0
    %1782 = vmatpush2.bf16.msra.mxu0 0
    %1783 = vmatprep.subr.bf16.mxu0 0
    %1784 = vmatpush2.bf16.msra.mxu0 0
    %1785 = vmatprep.subr.bf16.mxu0 0
    %1786 = vmatpush2.bf16.msra.mxu0 0
    %1787 = vmatprep.subr.bf16.mxu0 0
    %1788 = vmatpush2.bf16.msra.mxu0 0
    %1789 = vmatprep.subr.bf16.mxu0 0
    %1790 = vmatpush2.bf16.msra.mxu0 0
    %1791 = vmatprep.subr.bf16.mxu0 0
    %1792 = vmatpush2.bf16.msra.mxu0 0
    %1793 = vmatprep.mubr.bf16.mxu0 0
    %1794 = vmatmul.mubr.bf16.gmra.mxu0 %v1560
    %v1795 = vpop.f32.mrf.mxu0
    %v1796 = vadd.f32 0.0, %v1795
    %v1797 = vpop.f32.mrf.mxu0
    %v1798 = vpop.f32.mrf.mxu0
    %v1799 = vadd.f32 0.0, %v1798
    %v1800 = vpop.f32.mrf.mxu0
    %1801 = vmatprep.mubr.bf16.mxu0 0
    %1802 = vmatmul.mubr.bf16.gmra.mxu0 %v1563
    %v1803 = vpop.f32.mrf.mxu0
    %v1804 = vadd.f32 0.0, %v1803
    %v1805 = vpop.f32.mrf.mxu0
    %v1806 = vpop.f32.mrf.mxu0
    %v1807 = vadd.f32 0.0, %v1806
    %v1808 = vpop.f32.mrf.mxu0
    %1809 = vdwg.mxu0
    %1810 = vmatprep.subr.bf16.mxu0 0
    %1811 = vmatpush1.bf16.msra.mxu0 0
    %1812 = vmatprep.subr.bf16.mxu0 0
    %1813 = vmatpush1.bf16.msra.mxu0 0
    %1814 = vmatprep.subr.bf16.mxu0 0
    %1815 = vmatpush1.bf16.msra.mxu0 0
    %1816 = vmatprep.subr.bf16.mxu0 0
    %1817 = vmatpush1.bf16.msra.mxu0 0
    %1818 = vmatprep.subr.bf16.mxu0 0
    %1819 = vmatpush1.bf16.msra.mxu0 0
    %1820 = vmatprep.subr.bf16.mxu0 0
    %1821 = vmatpush1.bf16.msra.mxu0 0
    %1822 = vmatprep.subr.bf16.mxu0 0
    %1823 = vmatpush1.bf16.msra.mxu0 %v1543
    %1824 = vmatprep.subr.bf16.mxu0 0
    %1825 = vmatpush1.bf16.msra.mxu0 %v1542
    %1826 = vmatprep.subr.bf16.mxu0 0
    %1827 = vmatpush2.bf16.msra.mxu0 0
    %1828 = vmatprep.subr.bf16.mxu0 0
    %1829 = vmatpush2.bf16.msra.mxu0 0
    %1830 = vmatprep.subr.bf16.mxu0 0
    %1831 = vmatpush2.bf16.msra.mxu0 0
    %1832 = vmatprep.subr.bf16.mxu0 0
    %1833 = vmatpush2.bf16.msra.mxu0 0
    %1834 = vmatprep.subr.bf16.mxu0 0
    %1835 = vmatpush2.bf16.msra.mxu0 0
    %1836 = vmatprep.subr.bf16.mxu0 0
    %1837 = vmatpush2.bf16.msra.mxu0 0
    %1838 = vmatprep.subr.bf16.mxu0 0
    %1839 = vmatpush2.bf16.msra.mxu0 0
    %1840 = vmatprep.subr.bf16.mxu0 0
    %1841 = vmatpush2.bf16.msra.mxu0 0
    %1842 = vmatprep.mubr.bf16.mxu0 0
    %1843 = vmatmul.mubr.bf16.gmra.mxu0 %v1560
    %v1844 = vpop.f32.mrf.mxu0
    %v1845 = vadd.f32 0.0, %v1844
    %v1846 = vpop.f32.mrf.mxu0
    %v1847 = vpop.f32.mrf.mxu0
    %v1848 = vadd.f32 0.0, %v1847
    %v1849 = vpop.f32.mrf.mxu0
    %1850 = vmatprep.mubr.bf16.mxu0 0
    %1851 = vmatmul.mubr.bf16.gmra.mxu0 %v1563
    %v1852 = vpop.f32.mrf.mxu0
    %v1853 = vadd.f32 0.0, %v1852
    %v1854 = vpop.f32.mrf.mxu0
    %v1855 = vpop.f32.mrf.mxu0
    %v1856 = vadd.f32 0.0, %v1855
    %v1857 = vpop.f32.mrf.mxu0
    %1858 = vdwg.mxu0
    %1859 = vmatprep.subr.bf16.mxu0 0
    %1860 = vmatpush1.bf16.msra.mxu0 0
    %1861 = vmatprep.subr.bf16.mxu0 0
    %1862 = vmatpush1.bf16.msra.mxu0 0
    %1863 = vmatprep.subr.bf16.mxu0 0
    %1864 = vmatpush1.bf16.msra.mxu0 0
    %1865 = vmatprep.subr.bf16.mxu0 0
    %1866 = vmatpush1.bf16.msra.mxu0 0
    %1867 = vmatprep.subr.bf16.mxu0 0
    %1868 = vmatpush1.bf16.msra.mxu0 0
    %1869 = vmatprep.subr.bf16.mxu0 0
    %1870 = vmatpush1.bf16.msra.mxu0 0
    %1871 = vmatprep.subr.bf16.mxu0 0
    %1872 = vmatpush1.bf16.msra.mxu0 %v1545
    %1873 = vmatprep.subr.bf16.mxu0 0
    %1874 = vmatpush1.bf16.msra.mxu0 %v1544
    %1875 = vmatprep.subr.bf16.mxu0 0
    %1876 = vmatpush2.bf16.msra.mxu0 0
    %1877 = vmatprep.subr.bf16.mxu0 0
    %1878 = vmatpush2.bf16.msra.mxu0 0
    %1879 = vmatprep.subr.bf16.mxu0 0
    %1880 = vmatpush2.bf16.msra.mxu0 0
    %1881 = vmatprep.subr.bf16.mxu0 0
    %1882 = vmatpush2.bf16.msra.mxu0 0
    %1883 = vmatprep.subr.bf16.mxu0 0
    %1884 = vmatpush2.bf16.msra.mxu0 0
    %1885 = vmatprep.subr.bf16.mxu0 0
    %1886 = vmatpush2.bf16.msra.mxu0 0
    %1887 = vmatprep.subr.bf16.mxu0 0
    %1888 = vmatpush2.bf16.msra.mxu0 0
    %1889 = vmatprep.subr.bf16.mxu0 0
    %1890 = vmatpush2.bf16.msra.mxu0 0
    %1891 = vmatprep.mubr.bf16.mxu0 0
    %1892 = vmatmul.mubr.bf16.gmra.mxu0 %v1560
    %v1893 = vpop.f32.mrf.mxu0
    %v1894 = vadd.f32 0.0, %v1893
    %v1895 = vpop.f32.mrf.mxu0
    %v1896 = vpop.f32.mrf.mxu0
    %v1897 = vadd.f32 0.0, %v1896
    %v1898 = vpop.f32.mrf.mxu0
    %1899 = vmatprep.mubr.bf16.mxu0 0
    %1900 = vmatmul.mubr.bf16.gmra.mxu0 %v1563
    %v1901 = vpop.f32.mrf.mxu0
    %v1902 = vadd.f32 0.0, %v1901
    %v1903 = vpop.f32.mrf.mxu0
    %v1904 = vpop.f32.mrf.mxu0
    %v1905 = vadd.f32 0.0, %v1904
    %v1906 = vpop.f32.mrf.mxu0
    %1907 = vdwg.mxu0
    %1908 = vmatprep.subr.bf16.mxu0 0
    %1909 = vmatpush1.bf16.msra.mxu0 0
    %1910 = vmatprep.subr.bf16.mxu0 0
    %1911 = vmatpush1.bf16.msra.mxu0 0
    %1912 = vmatprep.subr.bf16.mxu0 0
    %1913 = vmatpush1.bf16.msra.mxu0 0
    %1914 = vmatprep.subr.bf16.mxu0 0
    %1915 = vmatpush1.bf16.msra.mxu0 0
    %1916 = vmatprep.subr.bf16.mxu0 0
    %1917 = vmatpush1.bf16.msra.mxu0 0
    %1918 = vmatprep.subr.bf16.mxu0 0
    %1919 = vmatpush1.bf16.msra.mxu0 0
    %1920 = vmatprep.subr.bf16.mxu0 0
    %1921 = vmatpush1.bf16.msra.mxu0 %v1547
    %1922 = vmatprep.subr.bf16.mxu0 0
    %1923 = vmatpush1.bf16.msra.mxu0 %v1546
    %1924 = vmatprep.subr.bf16.mxu0 0
    %1925 = vmatpush2.bf16.msra.mxu0 0
    %1926 = vmatprep.subr.bf16.mxu0 0
    %1927 = vmatpush2.bf16.msra.mxu0 0
    %1928 = vmatprep.subr.bf16.mxu0 0
    %1929 = vmatpush2.bf16.msra.mxu0 0
    %1930 = vmatprep.subr.bf16.mxu0 0
    %1931 = vmatpush2.bf16.msra.mxu0 0
    %1932 = vmatprep.subr.bf16.mxu0 0
    %1933 = vmatpush2.bf16.msra.mxu0 0
    %1934 = vmatprep.subr.bf16.mxu0 0
    %1935 = vmatpush2.bf16.msra.mxu0 0
    %1936 = vmatprep.subr.bf16.mxu0 0
    %1937 = vmatpush2.bf16.msra.mxu0 0
    %1938 = vmatprep.subr.bf16.mxu0 0
    %1939 = vmatpush2.bf16.msra.mxu0 0
    %1940 = vmatprep.mubr.bf16.mxu0 0
    %1941 = vmatmul.mubr.bf16.gmra.mxu0 %v1560
    %v1942 = vpop.f32.mrf.mxu0
    %v1943 = vadd.f32 0.0, %v1942
    %v1944 = vpop.f32.mrf.mxu0
    %v1945 = vpop.f32.mrf.mxu0
    %v1946 = vadd.f32 0.0, %v1945
    %v1947 = vpop.f32.mrf.mxu0
    %1948 = vmatprep.mubr.bf16.mxu0 0
    %1949 = vmatmul.mubr.bf16.gmra.mxu0 %v1563
    %v1950 = vpop.f32.mrf.mxu0
    %v1951 = vadd.f32 0.0, %v1950
    %v1952 = vpop.f32.mrf.mxu0
    %v1953 = vpop.f32.mrf.mxu0
    %v1954 = vadd.f32 0.0, %v1953
    %v1955 = vpop.f32.mrf.mxu0
    %1956 = vdwg.mxu0
    %v1961 = vunpack.c.l.b16 %v56
    %v1962 = vunpack.c.l.b16 %v57
    %v1963 = vunpack.c.l.b16 %v58
    %v1964 = vunpack.c.l.b16 %v59
    %v1965 = vpack.c.b16 %v1962, %v1961
    %v1966 = vpack.c.b16 %v1964, %v1963
    %vm1967 = vcmask 64512
    %v1969 = vsel %vm1967, %v1965, 0
    %v1972 = vsel %vm1967, %v1966, 0
    %v1975 = vsel %vm1003, %v60, 0
    %1977 = vmatprep.subr.bf16.mxu0 0
    %1978 = vmatpush1.bf16.msra.mxu0 0
    %1979 = vmatprep.subr.bf16.mxu0 0
    %1980 = vmatpush1.bf16.msra.mxu0 0
    %1981 = vmatprep.subr.bf16.mxu0 0
    %1982 = vmatpush1.bf16.msra.mxu0 0
    %1983 = vmatprep.subr.bf16.mxu0 0
    %1984 = vmatpush1.bf16.msra.mxu0 0
    %1985 = vmatprep.subr.bf16.mxu0 0
    %1986 = vmatpush1.bf16.msra.mxu0 0
    %1987 = vmatprep.subr.bf16.mxu0 0
    %1988 = vmatpush1.bf16.msra.mxu0 0
    %1989 = vmatprep.subr.bf16.mxu0 0
    %1990 = vmatpush1.bf16.msra.mxu0 0
    %1991 = vmatprep.subr.bf16.mxu0 0
    %1992 = vmatpush1.bf16.msra.mxu0 %v1975
    %1993 = vmatprep.subr.bf16.mxu0 0
    %1994 = vmatpush2.bf16.msra.mxu0 0
    %1995 = vmatprep.subr.bf16.mxu0 0
    %1996 = vmatpush2.bf16.msra.mxu0 0
    %1997 = vmatprep.subr.bf16.mxu0 0
    %1998 = vmatpush2.bf16.msra.mxu0 0
    %1999 = vmatprep.subr.bf16.mxu0 0
    %2000 = vmatpush2.bf16.msra.mxu0 0
    %2001 = vmatprep.subr.bf16.mxu0 0
    %2002 = vmatpush2.bf16.msra.mxu0 0
    %2003 = vmatprep.subr.bf16.mxu0 0
    %2004 = vmatpush2.bf16.msra.mxu0 0
    %2005 = vmatprep.subr.bf16.mxu0 0
    %2006 = vmatpush2.bf16.msra.mxu0 0
    %2007 = vmatprep.subr.bf16.mxu0 0
    %2008 = vmatpush2.bf16.msra.mxu0 0
    %2009 = vmatprep.mubr.bf16.mxu0 0
    %2010 = vmatmul.mubr.bf16.gmra.mxu0 %v1969
    %v2011 = vpop.f32.mrf.mxu0
    %v2012 = vadd.f32 %v1600, %v2011
    %v2013 = vpop.f32.mrf.mxu0
    %v2014 = vpop.f32.mrf.mxu0
    %v2015 = vadd.f32 %v1603, %v2014
    %v2016 = vpop.f32.mrf.mxu0
    %2017 = vmatprep.mubr.bf16.mxu0 0
    %2018 = vmatmul.mubr.bf16.gmra.mxu0 %v1972
    %v2019 = vpop.f32.mrf.mxu0
    %v2020 = vadd.f32 %v1608, %v2019
    %v2021 = vpop.f32.mrf.mxu0
    %v2022 = vpop.f32.mrf.mxu0
    %v2023 = vadd.f32 %v1611, %v2022
    %v2024 = vpop.f32.mrf.mxu0
    %2025 = vdwg.mxu0
    %v2027 = vsel %vm1003, %v61, 0
    %2029 = vmatprep.subr.bf16.mxu0 0
    %2030 = vmatpush1.bf16.msra.mxu0 0
    %2031 = vmatprep.subr.bf16.mxu0 0
    %2032 = vmatpush1.bf16.msra.mxu0 0
    %2033 = vmatprep.subr.bf16.mxu0 0
    %2034 = vmatpush1.bf16.msra.mxu0 0
    %2035 = vmatprep.subr.bf16.mxu0 0
    %2036 = vmatpush1.bf16.msra.mxu0 0
    %2037 = vmatprep.subr.bf16.mxu0 0
    %2038 = vmatpush1.bf16.msra.mxu0 0
    %2039 = vmatprep.subr.bf16.mxu0 0
    %2040 = vmatpush1.bf16.msra.mxu0 0
    %2041 = vmatprep.subr.bf16.mxu0 0
    %2042 = vmatpush1.bf16.msra.mxu0 0
    %2043 = vmatprep.subr.bf16.mxu0 0
    %2044 = vmatpush1.bf16.msra.mxu0 %v2027
    %2045 = vmatprep.subr.bf16.mxu0 0
    %2046 = vmatpush2.bf16.msra.mxu0 0
    %2047 = vmatprep.subr.bf16.mxu0 0
    %2048 = vmatpush2.bf16.msra.mxu0 0
    %2049 = vmatprep.subr.bf16.mxu0 0
    %2050 = vmatpush2.bf16.msra.mxu0 0
    %2051 = vmatprep.subr.bf16.mxu0 0
    %2052 = vmatpush2.bf16.msra.mxu0 0
    %2053 = vmatprep.subr.bf16.mxu0 0
    %2054 = vmatpush2.bf16.msra.mxu0 0
    %2055 = vmatprep.subr.bf16.mxu0 0
    %2056 = vmatpush2.bf16.msra.mxu0 0
    %2057 = vmatprep.subr.bf16.mxu0 0
    %2058 = vmatpush2.bf16.msra.mxu0 0
    %2059 = vmatprep.subr.bf16.mxu0 0
    %2060 = vmatpush2.bf16.msra.mxu0 0
    %2061 = vmatprep.mubr.bf16.mxu0 0
    %2062 = vmatmul.mubr.bf16.gmra.mxu0 %v1969
    %v2063 = vpop.f32.mrf.mxu0
    %v2064 = vadd.f32 %v1649, %v2063
    %v2065 = vpop.f32.mrf.mxu0
    %v2066 = vpop.f32.mrf.mxu0
    %v2067 = vadd.f32 %v1652, %v2066
    %v2068 = vpop.f32.mrf.mxu0
    %2069 = vmatprep.mubr.bf16.mxu0 0
    %2070 = vmatmul.mubr.bf16.gmra.mxu0 %v1972
    %v2071 = vpop.f32.mrf.mxu0
    %v2072 = vadd.f32 %v1657, %v2071
    %v2073 = vpop.f32.mrf.mxu0
    %v2074 = vpop.f32.mrf.mxu0
    %v2075 = vadd.f32 %v1660, %v2074
    %v2076 = vpop.f32.mrf.mxu0
    %2077 = vdwg.mxu0
    %v2079 = vsel %vm1003, %v62, 0
    %2081 = vmatprep.subr.bf16.mxu0 0
    %2082 = vmatpush1.bf16.msra.mxu0 0
    %2083 = vmatprep.subr.bf16.mxu0 0
    %2084 = vmatpush1.bf16.msra.mxu0 0
    %2085 = vmatprep.subr.bf16.mxu0 0
    %2086 = vmatpush1.bf16.msra.mxu0 0
    %2087 = vmatprep.subr.bf16.mxu0 0
    %2088 = vmatpush1.bf16.msra.mxu0 0
    %2089 = vmatprep.subr.bf16.mxu0 0
    %2090 = vmatpush1.bf16.msra.mxu0 0
    %2091 = vmatprep.subr.bf16.mxu0 0
    %2092 = vmatpush1.bf16.msra.mxu0 0
    %2093 = vmatprep.subr.bf16.mxu0 0
    %2094 = vmatpush1.bf16.msra.mxu0 0
    %2095 = vmatprep.subr.bf16.mxu0 0
    %2096 = vmatpush1.bf16.msra.mxu0 %v2079
    %2097 = vmatprep.subr.bf16.mxu0 0
    %2098 = vmatpush2.bf16.msra.mxu0 0
    %2099 = vmatprep.subr.bf16.mxu0 0
    %2100 = vmatpush2.bf16.msra.mxu0 0
    %2101 = vmatprep.subr.bf16.mxu0 0
    %2102 = vmatpush2.bf16.msra.mxu0 0
    %2103 = vmatprep.subr.bf16.mxu0 0
    %2104 = vmatpush2.bf16.msra.mxu0 0
    %2105 = vmatprep.subr.bf16.mxu0 0
    %2106 = vmatpush2.bf16.msra.mxu0 0
    %2107 = vmatprep.subr.bf16.mxu0 0
    %2108 = vmatpush2.bf16.msra.mxu0 0
    %2109 = vmatprep.subr.bf16.mxu0 0
    %2110 = vmatpush2.bf16.msra.mxu0 0
    %2111 = vmatprep.subr.bf16.mxu0 0
    %2112 = vmatpush2.bf16.msra.mxu0 0
    %2113 = vmatprep.mubr.bf16.mxu0 0
    %2114 = vmatmul.mubr.bf16.gmra.mxu0 %v1969
    %v2115 = vpop.f32.mrf.mxu0
    %v2116 = vadd.f32 %v1698, %v2115
    %v2117 = vpop.f32.mrf.mxu0
    %v2118 = vpop.f32.mrf.mxu0
    %v2119 = vadd.f32 %v1701, %v2118
    %v2120 = vpop.f32.mrf.mxu0
    %2121 = vmatprep.mubr.bf16.mxu0 0
    %2122 = vmatmul.mubr.bf16.gmra.mxu0 %v1972
    %v2123 = vpop.f32.mrf.mxu0
    %v2124 = vadd.f32 %v1706, %v2123
    %v2125 = vpop.f32.mrf.mxu0
    %v2126 = vpop.f32.mrf.mxu0
    %v2127 = vadd.f32 %v1709, %v2126
    %v2128 = vpop.f32.mrf.mxu0
    %2129 = vdwg.mxu0
    %v2131 = vsel %vm1003, %v63, 0
    %2133 = vmatprep.subr.bf16.mxu0 0
    %2134 = vmatpush1.bf16.msra.mxu0 0
    %2135 = vmatprep.subr.bf16.mxu0 0
    %2136 = vmatpush1.bf16.msra.mxu0 0
    %2137 = vmatprep.subr.bf16.mxu0 0
    %2138 = vmatpush1.bf16.msra.mxu0 0
    %2139 = vmatprep.subr.bf16.mxu0 0
    %2140 = vmatpush1.bf16.msra.mxu0 0
    %2141 = vmatprep.subr.bf16.mxu0 0
    %2142 = vmatpush1.bf16.msra.mxu0 0
    %2143 = vmatprep.subr.bf16.mxu0 0
    %2144 = vmatpush1.bf16.msra.mxu0 0
    %2145 = vmatprep.subr.bf16.mxu0 0
    %2146 = vmatpush1.bf16.msra.mxu0 0
    %2147 = vmatprep.subr.bf16.mxu0 0
    %2148 = vmatpush1.bf16.msra.mxu0 %v2131
    %2149 = vmatprep.subr.bf16.mxu0 0
    %2150 = vmatpush2.bf16.msra.mxu0 0
    %2151 = vmatprep.subr.bf16.mxu0 0
    %2152 = vmatpush2.bf16.msra.mxu0 0
    %2153 = vmatprep.subr.bf16.mxu0 0
    %2154 = vmatpush2.bf16.msra.mxu0 0
    %2155 = vmatprep.subr.bf16.mxu0 0
    %2156 = vmatpush2.bf16.msra.mxu0 0
    %2157 = vmatprep.subr.bf16.mxu0 0
    %2158 = vmatpush2.bf16.msra.mxu0 0
    %2159 = vmatprep.subr.bf16.mxu0 0
    %2160 = vmatpush2.bf16.msra.mxu0 0
    %2161 = vmatprep.subr.bf16.mxu0 0
    %2162 = vmatpush2.bf16.msra.mxu0 0
    %2163 = vmatprep.subr.bf16.mxu0 0
    %2164 = vmatpush2.bf16.msra.mxu0 0
    %2165 = vmatprep.mubr.bf16.mxu0 0
    %2166 = vmatmul.mubr.bf16.gmra.mxu0 %v1969
    %v2167 = vpop.f32.mrf.mxu0
    %v2168 = vadd.f32 %v1747, %v2167
    %v2169 = vpop.f32.mrf.mxu0
    %v2170 = vpop.f32.mrf.mxu0
    %v2171 = vadd.f32 %v1750, %v2170
    %v2172 = vpop.f32.mrf.mxu0
    %2173 = vmatprep.mubr.bf16.mxu0 0
    %2174 = vmatmul.mubr.bf16.gmra.mxu0 %v1972
    %v2175 = vpop.f32.mrf.mxu0
    %v2176 = vadd.f32 %v1755, %v2175
    %v2177 = vpop.f32.mrf.mxu0
    %v2178 = vpop.f32.mrf.mxu0
    %v2179 = vadd.f32 %v1758, %v2178
    %v2180 = vpop.f32.mrf.mxu0
    %2181 = vdwg.mxu0
    %v2183 = vsel %vm1003, %v64, 0
    %2185 = vmatprep.subr.bf16.mxu0 0
    %2186 = vmatpush1.bf16.msra.mxu0 0
    %2187 = vmatprep.subr.bf16.mxu0 0
    %2188 = vmatpush1.bf16.msra.mxu0 0
    %2189 = vmatprep.subr.bf16.mxu0 0
    %2190 = vmatpush1.bf16.msra.mxu0 0
    %2191 = vmatprep.subr.bf16.mxu0 0
    %2192 = vmatpush1.bf16.msra.mxu0 0
    %2193 = vmatprep.subr.bf16.mxu0 0
    %2194 = vmatpush1.bf16.msra.mxu0 0
    %2195 = vmatprep.subr.bf16.mxu0 0
    %2196 = vmatpush1.bf16.msra.mxu0 0
    %2197 = vmatprep.subr.bf16.mxu0 0
    %2198 = vmatpush1.bf16.msra.mxu0 0
    %2199 = vmatprep.subr.bf16.mxu0 0
    %2200 = vmatpush1.bf16.msra.mxu0 %v2183
    %2201 = vmatprep.subr.bf16.mxu0 0
    %2202 = vmatpush2.bf16.msra.mxu0 0
    %2203 = vmatprep.subr.bf16.mxu0 0
    %2204 = vmatpush2.bf16.msra.mxu0 0
    %2205 = vmatprep.subr.bf16.mxu0 0
    %2206 = vmatpush2.bf16.msra.mxu0 0
    %2207 = vmatprep.subr.bf16.mxu0 0
    %2208 = vmatpush2.bf16.msra.mxu0 0
    %2209 = vmatprep.subr.bf16.mxu0 0
    %2210 = vmatpush2.bf16.msra.mxu0 0
    %2211 = vmatprep.subr.bf16.mxu0 0
    %2212 = vmatpush2.bf16.msra.mxu0 0
    %2213 = vmatprep.subr.bf16.mxu0 0
    %2214 = vmatpush2.bf16.msra.mxu0 0
    %2215 = vmatprep.subr.bf16.mxu0 0
    %2216 = vmatpush2.bf16.msra.mxu0 0
    %2217 = vmatprep.mubr.bf16.mxu0 0
    %2218 = vmatmul.mubr.bf16.gmra.mxu0 %v1969
    %v2219 = vpop.f32.mrf.mxu0
    %v2220 = vadd.f32 %v1796, %v2219
    %v2221 = vpop.f32.mrf.mxu0
    %v2222 = vpop.f32.mrf.mxu0
    %v2223 = vadd.f32 %v1799, %v2222
    %v2224 = vpop.f32.mrf.mxu0
    %2225 = vmatprep.mubr.bf16.mxu0 0
    %2226 = vmatmul.mubr.bf16.gmra.mxu0 %v1972
    %v2227 = vpop.f32.mrf.mxu0
    %v2228 = vadd.f32 %v1804, %v2227
    %v2229 = vpop.f32.mrf.mxu0
    %v2230 = vpop.f32.mrf.mxu0
    %v2231 = vadd.f32 %v1807, %v2230
    %v2232 = vpop.f32.mrf.mxu0
    %2233 = vdwg.mxu0
    %v2235 = vsel %vm1003, %v65, 0
    %2237 = vmatprep.subr.bf16.mxu0 0
    %2238 = vmatpush1.bf16.msra.mxu0 0
    %2239 = vmatprep.subr.bf16.mxu0 0
    %2240 = vmatpush1.bf16.msra.mxu0 0
    %2241 = vmatprep.subr.bf16.mxu0 0
    %2242 = vmatpush1.bf16.msra.mxu0 0
    %2243 = vmatprep.subr.bf16.mxu0 0
    %2244 = vmatpush1.bf16.msra.mxu0 0
    %2245 = vmatprep.subr.bf16.mxu0 0
    %2246 = vmatpush1.bf16.msra.mxu0 0
    %2247 = vmatprep.subr.bf16.mxu0 0
    %2248 = vmatpush1.bf16.msra.mxu0 0
    %2249 = vmatprep.subr.bf16.mxu0 0
    %2250 = vmatpush1.bf16.msra.mxu0 0
    %2251 = vmatprep.subr.bf16.mxu0 0
    %2252 = vmatpush1.bf16.msra.mxu0 %v2235
    %2253 = vmatprep.subr.bf16.mxu0 0
    %2254 = vmatpush2.bf16.msra.mxu0 0
    %2255 = vmatprep.subr.bf16.mxu0 0
    %2256 = vmatpush2.bf16.msra.mxu0 0
    %2257 = vmatprep.subr.bf16.mxu0 0
    %2258 = vmatpush2.bf16.msra.mxu0 0
    %2259 = vmatprep.subr.bf16.mxu0 0
    %2260 = vmatpush2.bf16.msra.mxu0 0
    %2261 = vmatprep.subr.bf16.mxu0 0
    %2262 = vmatpush2.bf16.msra.mxu0 0
    %2263 = vmatprep.subr.bf16.mxu0 0
    %2264 = vmatpush2.bf16.msra.mxu0 0
    %2265 = vmatprep.subr.bf16.mxu0 0
    %2266 = vmatpush2.bf16.msra.mxu0 0
    %2267 = vmatprep.subr.bf16.mxu0 0
    %2268 = vmatpush2.bf16.msra.mxu0 0
    %2269 = vmatprep.mubr.bf16.mxu0 0
    %2270 = vmatmul.mubr.bf16.gmra.mxu0 %v1969
    %v2271 = vpop.f32.mrf.mxu0
    %v2272 = vadd.f32 %v1845, %v2271
    %v2273 = vpop.f32.mrf.mxu0
    %v2274 = vpop.f32.mrf.mxu0
    %v2275 = vadd.f32 %v1848, %v2274
    %v2276 = vpop.f32.mrf.mxu0
    %2277 = vmatprep.mubr.bf16.mxu0 0
    %2278 = vmatmul.mubr.bf16.gmra.mxu0 %v1972
    %v2279 = vpop.f32.mrf.mxu0
    %v2280 = vadd.f32 %v1853, %v2279
    %v2281 = vpop.f32.mrf.mxu0
    %v2282 = vpop.f32.mrf.mxu0
    %v2283 = vadd.f32 %v1856, %v2282
    %v2284 = vpop.f32.mrf.mxu0
    %2285 = vdwg.mxu0
    %v2287 = vsel %vm1003, %v66, 0
    %2289 = vmatprep.subr.bf16.mxu0 0
    %2290 = vmatpush1.bf16.msra.mxu0 0
    %2291 = vmatprep.subr.bf16.mxu0 0
    %2292 = vmatpush1.bf16.msra.mxu0 0
    %2293 = vmatprep.subr.bf16.mxu0 0
    %2294 = vmatpush1.bf16.msra.mxu0 0
    %2295 = vmatprep.subr.bf16.mxu0 0
    %2296 = vmatpush1.bf16.msra.mxu0 0
    %2297 = vmatprep.subr.bf16.mxu0 0
    %2298 = vmatpush1.bf16.msra.mxu0 0
    %2299 = vmatprep.subr.bf16.mxu0 0
    %2300 = vmatpush1.bf16.msra.mxu0 0
    %2301 = vmatprep.subr.bf16.mxu0 0
    %2302 = vmatpush1.bf16.msra.mxu0 0
    %2303 = vmatprep.subr.bf16.mxu0 0
    %2304 = vmatpush1.bf16.msra.mxu0 %v2287
    %2305 = vmatprep.subr.bf16.mxu0 0
    %2306 = vmatpush2.bf16.msra.mxu0 0
    %2307 = vmatprep.subr.bf16.mxu0 0
    %2308 = vmatpush2.bf16.msra.mxu0 0
    %2309 = vmatprep.subr.bf16.mxu0 0
    %2310 = vmatpush2.bf16.msra.mxu0 0
    %2311 = vmatprep.subr.bf16.mxu0 0
    %2312 = vmatpush2.bf16.msra.mxu0 0
    %2313 = vmatprep.subr.bf16.mxu0 0
    %2314 = vmatpush2.bf16.msra.mxu0 0
    %2315 = vmatprep.subr.bf16.mxu0 0
    %2316 = vmatpush2.bf16.msra.mxu0 0
    %2317 = vmatprep.subr.bf16.mxu0 0
    %2318 = vmatpush2.bf16.msra.mxu0 0
    %2319 = vmatprep.subr.bf16.mxu0 0
    %2320 = vmatpush2.bf16.msra.mxu0 0
    %2321 = vmatprep.mubr.bf16.mxu0 0
    %2322 = vmatmul.mubr.bf16.gmra.mxu0 %v1969
    %v2323 = vpop.f32.mrf.mxu0
    %v2324 = vadd.f32 %v1894, %v2323
    %v2325 = vpop.f32.mrf.mxu0
    %v2326 = vpop.f32.mrf.mxu0
    %v2327 = vadd.f32 %v1897, %v2326
    %v2328 = vpop.f32.mrf.mxu0
    %2329 = vmatprep.mubr.bf16.mxu0 0
    %2330 = vmatmul.mubr.bf16.gmra.mxu0 %v1972
    %v2331 = vpop.f32.mrf.mxu0
    %v2332 = vadd.f32 %v1902, %v2331
    %v2333 = vpop.f32.mrf.mxu0
    %v2334 = vpop.f32.mrf.mxu0
    %v2335 = vadd.f32 %v1905, %v2334
    %v2336 = vpop.f32.mrf.mxu0
    %2337 = vdwg.mxu0
    %v2339 = vsel %vm1003, %v67, 0
    %2341 = vmatprep.subr.bf16.mxu0 0
    %2342 = vmatpush1.bf16.msra.mxu0 0
    %2343 = vmatprep.subr.bf16.mxu0 0
    %2344 = vmatpush1.bf16.msra.mxu0 0
    %2345 = vmatprep.subr.bf16.mxu0 0
    %2346 = vmatpush1.bf16.msra.mxu0 0
    %2347 = vmatprep.subr.bf16.mxu0 0
    %2348 = vmatpush1.bf16.msra.mxu0 0
    %2349 = vmatprep.subr.bf16.mxu0 0
    %2350 = vmatpush1.bf16.msra.mxu0 0
    %2351 = vmatprep.subr.bf16.mxu0 0
    %2352 = vmatpush1.bf16.msra.mxu0 0
    %2353 = vmatprep.subr.bf16.mxu0 0
    %2354 = vmatpush1.bf16.msra.mxu0 0
    %2355 = vmatprep.subr.bf16.mxu0 0
    %2356 = vmatpush1.bf16.msra.mxu0 %v2339
    %2357 = vmatprep.subr.bf16.mxu0 0
    %2358 = vmatpush2.bf16.msra.mxu0 0
    %2359 = vmatprep.subr.bf16.mxu0 0
    %2360 = vmatpush2.bf16.msra.mxu0 0
    %2361 = vmatprep.subr.bf16.mxu0 0
    %2362 = vmatpush2.bf16.msra.mxu0 0
    %2363 = vmatprep.subr.bf16.mxu0 0
    %2364 = vmatpush2.bf16.msra.mxu0 0
    %2365 = vmatprep.subr.bf16.mxu0 0
    %2366 = vmatpush2.bf16.msra.mxu0 0
    %2367 = vmatprep.subr.bf16.mxu0 0
    %2368 = vmatpush2.bf16.msra.mxu0 0
    %2369 = vmatprep.subr.bf16.mxu0 0
    %2370 = vmatpush2.bf16.msra.mxu0 0
    %2371 = vmatprep.subr.bf16.mxu0 0
    %2372 = vmatpush2.bf16.msra.mxu0 0
    %2373 = vmatprep.mubr.bf16.mxu0 0
    %2374 = vmatmul.mubr.bf16.gmra.mxu0 %v1969
    %v2375 = vpop.f32.mrf.mxu0
    %v2376 = vadd.f32 %v1943, %v2375
    %v2377 = vpop.f32.mrf.mxu0
    %v2378 = vpop.f32.mrf.mxu0
    %v2379 = vadd.f32 %v1946, %v2378
    %v2380 = vpop.f32.mrf.mxu0
    %2381 = vmatprep.mubr.bf16.mxu0 0
    %2382 = vmatmul.mubr.bf16.gmra.mxu0 %v1972
    %v2383 = vpop.f32.mrf.mxu0
    %v2384 = vadd.f32 %v1951, %v2383
    %v2385 = vpop.f32.mrf.mxu0
    %v2386 = vpop.f32.mrf.mxu0
    %v2387 = vadd.f32 %v1954, %v2386
    %v2388 = vpop.f32.mrf.mxu0
    %2389 = vdwg.mxu0
    %v2390 = vld [vmem:[%s0] sm:$0xff]
    %v2391 = vlaneseq
    %v2392 = vshrl.u32 %v2391, 7
    %v2393 = vsub.s32 0, %v2392
    %v2394 = vrot.slane %v2390, %v2393
    %2396 = vbcast.lane.b32.xlu0 %v2394, 256
    %v2397 = vpop.permute.xlu0 %2396
    %s2399 = sor.u32 256, 8
    %2400 = vbcast.lane.b32.xlu0 %v2394, %s2399
    %v2401 = vpop.permute.xlu0 %2400
    %s2403 = sor.u32 256, 16
    %2404 = vbcast.lane.b32.xlu0 %v2394, %s2403
    %v2405 = vpop.permute.xlu0 %2404
    %s2407 = sor.u32 256, 24
    %2408 = vbcast.lane.b32.xlu0 %v2394, %s2407
    %v2409 = vpop.permute.xlu0 %2408
    %v2410 = vlaneseq
    %v2411 = vshrl.u32 %v2410, 7
    %v2412 = vsub.s32 1, %v2411
    %v2413 = vrot.slane %v2390, %v2412
    %2415 = vbcast.lane.b32.xlu0 %v2413, 256
    %v2416 = vpop.permute.xlu0 %2415
    %s2418 = sor.u32 256, 8
    %2419 = vbcast.lane.b32.xlu0 %v2413, %s2418
    %v2420 = vpop.permute.xlu0 %2419
    %s2422 = sor.u32 256, 16
    %2423 = vbcast.lane.b32.xlu0 %v2413, %s2422
    %v2424 = vpop.permute.xlu0 %2423
    %s2426 = sor.u32 256, 24
    %2427 = vbcast.lane.b32.xlu0 %v2413, %s2426
    %v2428 = vpop.permute.xlu0 %2427
    %v2429 = vlaneseq
    %v2430 = vshrl.u32 %v2429, 7
    %v2431 = vsub.s32 2, %v2430
    %v2432 = vrot.slane %v2390, %v2431
    %2434 = vbcast.lane.b32.xlu0 %v2432, 256
    %v2435 = vpop.permute.xlu0 %2434
    %s2437 = sor.u32 256, 8
    %2438 = vbcast.lane.b32.xlu0 %v2432, %s2437
    %v2439 = vpop.permute.xlu0 %2438
    %s2441 = sor.u32 256, 16
    %2442 = vbcast.lane.b32.xlu0 %v2432, %s2441
    %v2443 = vpop.permute.xlu0 %2442
    %s2445 = sor.u32 256, 24
    %2446 = vbcast.lane.b32.xlu0 %v2432, %s2445
    %v2447 = vpop.permute.xlu0 %2446
    %v2448 = vlaneseq
    %v2449 = vshrl.u32 %v2448, 7
    %v2450 = vsub.s32 3, %v2449
    %v2451 = vrot.slane %v2390, %v2450
    %2453 = vbcast.lane.b32.xlu0 %v2451, 256
    %v2454 = vpop.permute.xlu0 %2453
    %s2456 = sor.u32 256, 8
    %2457 = vbcast.lane.b32.xlu0 %v2451, %s2456
    %v2458 = vpop.permute.xlu0 %2457
    %s2460 = sor.u32 256, 16
    %2461 = vbcast.lane.b32.xlu0 %v2451, %s2460
    %v2462 = vpop.permute.xlu0 %2461
    %s2464 = sor.u32 256, 24
    %2465 = vbcast.lane.b32.xlu0 %v2451, %s2464
    %v2466 = vpop.permute.xlu0 %2465
    %v2467 = vlaneseq
    %v2468 = vshrl.u32 %v2467, 7
    %v2469 = vsub.s32 4, %v2468
    %v2470 = vrot.slane %v2390, %v2469
    %2472 = vbcast.lane.b32.xlu0 %v2470, 256
    %v2473 = vpop.permute.xlu0 %2472
    %s2475 = sor.u32 256, 8
    %2476 = vbcast.lane.b32.xlu0 %v2470, %s2475
    %v2477 = vpop.permute.xlu0 %2476
    %s2479 = sor.u32 256, 16
    %2480 = vbcast.lane.b32.xlu0 %v2470, %s2479
    %v2481 = vpop.permute.xlu0 %2480
    %s2483 = sor.u32 256, 24
    %2484 = vbcast.lane.b32.xlu0 %v2470, %s2483
    %v2485 = vpop.permute.xlu0 %2484
    %v2486 = vlaneseq
    %v2487 = vshrl.u32 %v2486, 7
    %v2488 = vsub.s32 5, %v2487
    %v2489 = vrot.slane %v2390, %v2488
    %2491 = vbcast.lane.b32.xlu0 %v2489, 256
    %v2492 = vpop.permute.xlu0 %2491
    %s2494 = sor.u32 256, 8
    %2495 = vbcast.lane.b32.xlu0 %v2489, %s2494
    %v2496 = vpop.permute.xlu0 %2495
    %s2498 = sor.u32 256, 16
    %2499 = vbcast.lane.b32.xlu0 %v2489, %s2498
    %v2500 = vpop.permute.xlu0 %2499
    %s2502 = sor.u32 256, 24
    %2503 = vbcast.lane.b32.xlu0 %v2489, %s2502
    %v2504 = vpop.permute.xlu0 %2503
    %v2505 = vlaneseq
    %v2506 = vshrl.u32 %v2505, 7
    %v2507 = vsub.s32 6, %v2506
    %v2508 = vrot.slane %v2390, %v2507
    %2510 = vbcast.lane.b32.xlu0 %v2508, 256
    %v2511 = vpop.permute.xlu0 %2510
    %s2513 = sor.u32 256, 8
    %2514 = vbcast.lane.b32.xlu0 %v2508, %s2513
    %v2515 = vpop.permute.xlu0 %2514
    %s2517 = sor.u32 256, 16
    %2518 = vbcast.lane.b32.xlu0 %v2508, %s2517
    %v2519 = vpop.permute.xlu0 %2518
    %s2521 = sor.u32 256, 24
    %2522 = vbcast.lane.b32.xlu0 %v2508, %s2521
    %v2523 = vpop.permute.xlu0 %2522
    %v2524 = vlaneseq
    %v2525 = vshrl.u32 %v2524, 7
    %v2526 = vsub.s32 7, %v2525
    %v2527 = vrot.slane %v2390, %v2526
    %2529 = vbcast.lane.b32.xlu0 %v2527, 256
    %v2530 = vpop.permute.xlu0 %2529
    %s2532 = sor.u32 256, 8
    %2533 = vbcast.lane.b32.xlu0 %v2527, %s2532
    %v2534 = vpop.permute.xlu0 %2533
    %s2536 = sor.u32 256, 16
    %2537 = vbcast.lane.b32.xlu0 %v2527, %s2536
    %v2538 = vpop.permute.xlu0 %2537
    %s2540 = sor.u32 256, 24
    %2541 = vbcast.lane.b32.xlu0 %v2527, %s2540
    %v2542 = vpop.permute.xlu0 %2541
    %v2543 = vadd.f32 %v2012, %v2397
    %v2544 = vadd.f32 %v2015, %v2401
    %v2545 = vadd.f32 %v2020, %v2405
    %v2546 = vadd.f32 %v2023, %v2409
    %v2547 = vadd.f32 %v2064, %v2416
    %v2548 = vadd.f32 %v2067, %v2420
    %v2549 = vadd.f32 %v2072, %v2424
    %v2550 = vadd.f32 %v2075, %v2428
    %v2551 = vadd.f32 %v2116, %v2435
    %v2552 = vadd.f32 %v2119, %v2439
    %v2553 = vadd.f32 %v2124, %v2443
    %v2554 = vadd.f32 %v2127, %v2447
    %v2555 = vadd.f32 %v2168, %v2454
    %v2556 = vadd.f32 %v2171, %v2458
    %v2557 = vadd.f32 %v2176, %v2462
    %v2558 = vadd.f32 %v2179, %v2466
    %v2559 = vadd.f32 %v2220, %v2473
    %v2560 = vadd.f32 %v2223, %v2477
    %v2561 = vadd.f32 %v2228, %v2481
    %v2562 = vadd.f32 %v2231, %v2485
    %v2563 = vadd.f32 %v2272, %v2492
    %v2564 = vadd.f32 %v2275, %v2496
    %v2565 = vadd.f32 %v2280, %v2500
    %v2566 = vadd.f32 %v2283, %v2504
    %v2567 = vadd.f32 %v2324, %v2511
    %v2568 = vadd.f32 %v2327, %v2515
    %v2569 = vadd.f32 %v2332, %v2519
    %v2570 = vadd.f32 %v2335, %v2523
    %v2571 = vadd.f32 %v2376, %v2530
    %v2572 = vadd.f32 %v2379, %v2534
    %v2573 = vadd.f32 %v2384, %v2538
    %v2574 = vadd.f32 %v2387, %v2542
    %v2575 = vtanh.pop %v2543
    %v2576 = vtanh.pop %v2544
    %v2577 = vtanh.pop %v2545
    %v2578 = vtanh.pop %v2546
    %v2579 = vtanh.pop %v2547
    %v2580 = vtanh.pop %v2548
    %v2581 = vtanh.pop %v2549
    %v2582 = vtanh.pop %v2550
    %v2583 = vtanh.pop %v2551
    %v2584 = vtanh.pop %v2552
    %v2585 = vtanh.pop %v2553
    %v2586 = vtanh.pop %v2554
    %v2587 = vtanh.pop %v2555
    %v2588 = vtanh.pop %v2556
    %v2589 = vtanh.pop %v2557
    %v2590 = vtanh.pop %v2558
    %v2591 = vtanh.pop %v2559
    %v2592 = vtanh.pop %v2560
    %v2593 = vtanh.pop %v2561
    %v2594 = vtanh.pop %v2562
    %v2595 = vtanh.pop %v2563
    %v2596 = vtanh.pop %v2564
    %v2597 = vtanh.pop %v2565
    %v2598 = vtanh.pop %v2566
    %v2599 = vtanh.pop %v2567
    %v2600 = vtanh.pop %v2568
    %v2601 = vtanh.pop %v2569
    %v2602 = vtanh.pop %v2570
    %v2603 = vtanh.pop %v2571
    %v2604 = vtanh.pop %v2572
    %v2605 = vtanh.pop %v2573
    %v2606 = vtanh.pop %v2574
    %v2607 = vld [vmem:[%s3] sm:$0xff]
    %v2608 = vld [vmem:[%s3 + $0x8] sm:$0xff]
    %v2609 = vld [vmem:[%s3 + $0x10] sm:$0xff]
    %v2610 = vld [vmem:[%s3 + $0x18] sm:$0xff]
    %2612 = vset.pattern.permute.xlu0 0
    %2613 = vperm.xlu0 %2612, %v2607
    %v2614 = vpop.permute.xlu0 %2613
    %2617 = vset.pattern.permute.xlu0 0
    %2618 = vperm.xlu0 %2617, %v2608
    %v2619 = vpop.permute.xlu0 %2618
    %2622 = vset.pattern.permute.xlu0 0
    %2623 = vperm.xlu0 %2622, %v2609
    %v2624 = vpop.permute.xlu0 %2623
    %2627 = vset.pattern.permute.xlu0 0
    %2628 = vperm.xlu0 %2627, %v2610
    %v2629 = vpop.permute.xlu0 %2628
    %v2631 = vmul.f32 %v2575, %v2614
    %v2632 = vmul.f32 %v2576, %v2619
    %v2633 = vmul.f32 %v2577, %v2624
    %v2634 = vmul.f32 %v2578, %v2629
    %v2635 = vmul.f32 %v2579, %v2614
    %v2636 = vmul.f32 %v2580, %v2619
    %v2637 = vmul.f32 %v2581, %v2624
    %v2638 = vmul.f32 %v2582, %v2629
    %v2639 = vmul.f32 %v2583, %v2614
    %v2640 = vmul.f32 %v2584, %v2619
    %v2641 = vmul.f32 %v2585, %v2624
    %v2642 = vmul.f32 %v2586, %v2629
    %v2643 = vmul.f32 %v2587, %v2614
    %v2644 = vmul.f32 %v2588, %v2619
    %v2645 = vmul.f32 %v2589, %v2624
    %v2646 = vmul.f32 %v2590, %v2629
    %v2647 = vmul.f32 %v2591, %v2614
    %v2648 = vmul.f32 %v2592, %v2619
    %v2649 = vmul.f32 %v2593, %v2624
    %v2650 = vmul.f32 %v2594, %v2629
    %v2651 = vmul.f32 %v2595, %v2614
    %v2652 = vmul.f32 %v2596, %v2619
    %v2653 = vmul.f32 %v2597, %v2624
    %v2654 = vmul.f32 %v2598, %v2629
    %v2655 = vmul.f32 %v2599, %v2614
    %v2656 = vmul.f32 %v2600, %v2619
    %v2657 = vmul.f32 %v2601, %v2624
    %v2658 = vmul.f32 %v2602, %v2629
    %v2659 = vmul.f32 %v2603, %v2614
    %v2660 = vmul.f32 %v2604, %v2619
    %v2661 = vmul.f32 %v2605, %v2624
    %v2662 = vmul.f32 %v2606, %v2629
    %v2663 = vadd.f32 %v2631, %v2632
    %v2664 = vadd.f32 %v2663, %v2633
    %v2665 = vadd.f32 %v2664, %v2634
    %v2666 = vrot.slane %v2665, 4
    %v2667 = vadd.f32 %v2665, %v2666
    %v2668 = vrot.slane %v2667, 2
    %v2669 = vadd.f32 %v2667, %v2668
    %v2670 = vrot.slane %v2669, 1
    %v2671 = vadd.f32 %v2669, %v2670
    %v2672 = vadd.f32 %v2635, %v2636
    %v2673 = vadd.f32 %v2672, %v2637
    %v2674 = vadd.f32 %v2673, %v2638
    %v2675 = vrot.slane %v2674, 4
    %v2676 = vadd.f32 %v2674, %v2675
    %v2677 = vrot.slane %v2676, 2
    %v2678 = vadd.f32 %v2676, %v2677
    %v2679 = vrot.slane %v2678, 1
    %v2680 = vadd.f32 %v2678, %v2679
    %v2681 = vadd.f32 %v2639, %v2640
    %v2682 = vadd.f32 %v2681, %v2641
    %v2683 = vadd.f32 %v2682, %v2642
    %v2684 = vrot.slane %v2683, 4
    %v2685 = vadd.f32 %v2683, %v2684
    %v2686 = vrot.slane %v2685, 2
    %v2687 = vadd.f32 %v2685, %v2686
    %v2688 = vrot.slane %v2687, 1
    %v2689 = vadd.f32 %v2687, %v2688
    %v2690 = vadd.f32 %v2643, %v2644
    %v2691 = vadd.f32 %v2690, %v2645
    %v2692 = vadd.f32 %v2691, %v2646
    %v2693 = vrot.slane %v2692, 4
    %v2694 = vadd.f32 %v2692, %v2693
    %v2695 = vrot.slane %v2694, 2
    %v2696 = vadd.f32 %v2694, %v2695
    %v2697 = vrot.slane %v2696, 1
    %v2698 = vadd.f32 %v2696, %v2697
    %v2699 = vadd.f32 %v2647, %v2648
    %v2700 = vadd.f32 %v2699, %v2649
    %v2701 = vadd.f32 %v2700, %v2650
    %v2702 = vrot.slane %v2701, 4
    %v2703 = vadd.f32 %v2701, %v2702
    %v2704 = vrot.slane %v2703, 2
    %v2705 = vadd.f32 %v2703, %v2704
    %v2706 = vrot.slane %v2705, 1
    %v2707 = vadd.f32 %v2705, %v2706
    %v2708 = vadd.f32 %v2651, %v2652
    %v2709 = vadd.f32 %v2708, %v2653
    %v2710 = vadd.f32 %v2709, %v2654
    %v2711 = vrot.slane %v2710, 4
    %v2712 = vadd.f32 %v2710, %v2711
    %v2713 = vrot.slane %v2712, 2
    %v2714 = vadd.f32 %v2712, %v2713
    %v2715 = vrot.slane %v2714, 1
    %v2716 = vadd.f32 %v2714, %v2715
    %v2717 = vadd.f32 %v2655, %v2656
    %v2718 = vadd.f32 %v2717, %v2657
    %v2719 = vadd.f32 %v2718, %v2658
    %v2720 = vrot.slane %v2719, 4
    %v2721 = vadd.f32 %v2719, %v2720
    %v2722 = vrot.slane %v2721, 2
    %v2723 = vadd.f32 %v2721, %v2722
    %v2724 = vrot.slane %v2723, 1
    %v2725 = vadd.f32 %v2723, %v2724
    %v2726 = vadd.f32 %v2659, %v2660
    %v2727 = vadd.f32 %v2726, %v2661
    %v2728 = vadd.f32 %v2727, %v2662
    %v2729 = vrot.slane %v2728, 4
    %v2730 = vadd.f32 %v2728, %v2729
    %v2731 = vrot.slane %v2730, 2
    %v2732 = vadd.f32 %v2730, %v2731
    %v2733 = vrot.slane %v2732, 1
    %v2734 = vadd.f32 %v2732, %v2733
    %v2735 = vxor.u32 %v2671, 2147483648
    %v2736 = vxor.u32 %v2680, 2147483648
    %v2737 = vxor.u32 %v2689, 2147483648
    %v2738 = vxor.u32 %v2698, 2147483648
    %v2739 = vxor.u32 %v2707, 2147483648
    %v2740 = vxor.u32 %v2716, 2147483648
    %v2741 = vxor.u32 %v2725, 2147483648
    %v2742 = vxor.u32 %v2734, 2147483648
    %v2743 = vmul.f32 %v2735, 1.442695
    %v2744 = vpow.pop %v2743
    %v2745 = vmul.f32 %v2736, 1.442695
    %v2746 = vpow.pop %v2745
    %v2747 = vmul.f32 %v2737, 1.442695
    %v2748 = vpow.pop %v2747
    %v2749 = vmul.f32 %v2738, 1.442695
    %v2750 = vpow.pop %v2749
    %v2751 = vmul.f32 %v2739, 1.442695
    %v2752 = vpow.pop %v2751
    %v2753 = vmul.f32 %v2740, 1.442695
    %v2754 = vpow.pop %v2753
    %v2755 = vmul.f32 %v2741, 1.442695
    %v2756 = vpow.pop %v2755
    %v2757 = vmul.f32 %v2742, 1.442695
    %v2758 = vpow.pop %v2757
    %v2759 = vadd.f32 %v2744, 1.0
    %v2760 = vadd.f32 %v2746, 1.0
    %v2761 = vadd.f32 %v2748, 1.0
    %v2762 = vadd.f32 %v2750, 1.0
    %v2763 = vadd.f32 %v2752, 1.0
    %v2764 = vadd.f32 %v2754, 1.0
    %v2765 = vadd.f32 %v2756, 1.0
    %v2766 = vadd.f32 %v2758, 1.0
    %v2767 = vrcp.pop %v2759
    %v2768 = vmul.f32 1.0, %v2767
    %v2769 = vrcp.pop %v2760
    %v2770 = vmul.f32 1.0, %v2769
    %v2771 = vrcp.pop %v2761
    %v2772 = vmul.f32 1.0, %v2771
    %v2773 = vrcp.pop %v2762
    %v2774 = vmul.f32 1.0, %v2773
    %v2775 = vrcp.pop %v2763
    %v2776 = vmul.f32 1.0, %v2775
    %v2777 = vrcp.pop %v2764
    %v2778 = vmul.f32 1.0, %v2777
    %v2779 = vrcp.pop %v2765
    %v2780 = vmul.f32 1.0, %v2779
    %v2781 = vrcp.pop %v2766
    %v2782 = vmul.f32 1.0, %v2781
    %v2783 = vld [vmem:[%s5] sm:$0xff]
    %v2785 = vrot.slane %v2783, 1
    %v2786 = vrot.slane %v2783, 2
    %v2787 = vrot.slane %v2783, 3
    %v2788 = vrot.slane %v2783, 4
    %v2789 = vrot.slane %v2783, 5
    %v2790 = vrot.slane %v2783, 6
    %v2791 = vrot.slane %v2783, 7
    %v2800 = vmul.f32 %v2768, %v2783
    %v2801 = vmul.f32 %v2770, %v2785
    %v2802 = vmul.f32 %v2772, %v2786
    %v2803 = vmul.f32 %v2774, %v2787
    %v2804 = vmul.f32 %v2776, %v2788
    %v2805 = vmul.f32 %v2778, %v2789
    %v2806 = vmul.f32 %v2780, %v2790
    %v2807 = vmul.f32 %v2782, %v2791
    %v2816 = vrot.slane %v2801, 7
    %vm2817 = vcmask 1041409
    %v2818 = vsel %vm2817, %v2816, %v2800
    %v2819 = vrot.slane %v2802, 6
    %vm2820 = vcmask 1042434
    %v2821 = vsel %vm2820, %v2819, %v2818
    %v2822 = vrot.slane %v2803, 5
    %vm2823 = vcmask 1043459
    %v2824 = vsel %vm2823, %v2822, %v2821
    %v2825 = vrot.slane %v2804, 4
    %vm2826 = vcmask 1044484
    %v2827 = vsel %vm2826, %v2825, %v2824
    %v2828 = vrot.slane %v2805, 3
    %vm2829 = vcmask 1045509
    %v2830 = vsel %vm2829, %v2828, %v2827
    %v2831 = vrot.slane %v2806, 2
    %vm2832 = vcmask 1046534
    %v2833 = vsel %vm2832, %v2831, %v2830
    %v2834 = vrot.slane %v2807, 1
    %vm2835 = vcmask 1047559
    %v2836 = vsel %vm2835, %v2834, %v2833
    %2838 = vadd.xlane.f32.xlu0 %v2836
    %v2839 = vpop.xlane.xlu0 %2838
    %v2840 = vrcp.pop %v2839
    %v2842 = vrot.slane %v2840, 1
    %v2843 = vrot.slane %v2840, 2
    %v2844 = vrot.slane %v2840, 3
    %v2845 = vrot.slane %v2840, 4
    %v2846 = vrot.slane %v2840, 5
    %v2847 = vrot.slane %v2840, 6
    %v2848 = vrot.slane %v2840, 7
    %v2857 = vmul.f32 %v2800, %v2840
    %v2858 = vmul.f32 %v2801, %v2842
    %v2859 = vmul.f32 %v2802, %v2843
    %v2860 = vmul.f32 %v2803, %v2844
    %v2861 = vmul.f32 %v2804, %v2845
    %v2862 = vmul.f32 %v2805, %v2846
    %v2863 = vmul.f32 %v2806, %v2847
    %v2864 = vmul.f32 %v2807, %v2848
    %v2873 = vrot.slane %v2858, 7
    %v2874 = vsel %vm2817, %v2873, %v2857
    %v2875 = vrot.slane %v2859, 6
    %v2876 = vsel %vm2820, %v2875, %v2874
    %v2877 = vrot.slane %v2860, 5
    %v2878 = vsel %vm2823, %v2877, %v2876
    %v2879 = vrot.slane %v2861, 4
    %v2880 = vsel %vm2826, %v2879, %v2878
    %v2881 = vrot.slane %v2862, 3
    %v2882 = vsel %vm2829, %v2881, %v2880
    %v2883 = vrot.slane %v2863, 2
    %v2884 = vsel %vm2832, %v2883, %v2882
    %v2885 = vrot.slane %v2864, 1
    %v2886 = vsel %vm2835, %v2885, %v2884
    %2888 = vst [vmem:[#allocation6] sm:$0xff] %v2886
    %v2889 = vrot.slane %v54, 1
    %v2890 = vrot.slane %v55, 1
    %v2891 = vrot.slane %v54, 2
    %v2892 = vrot.slane %v55, 2
    %v2893 = vrot.slane %v54, 3
    %v2894 = vrot.slane %v55, 3
    %v2895 = vrot.slane %v54, 4
    %v2896 = vrot.slane %v55, 4
    %v2897 = vrot.slane %v54, 5
    %v2898 = vrot.slane %v55, 5
    %v2899 = vrot.slane %v54, 6
    %v2900 = vrot.slane %v55, 6
    %v2901 = vrot.slane %v54, 7
    %v2902 = vrot.slane %v55, 7
    %2903 = vrot.lane.b32.xlu0 %v54, 113
    %v2904 = vpop.permute.xlu0 %2903
    %2905 = vrot.lane.b32.xlu0 %v55, 113
    %v2906 = vpop.permute.xlu0 %2905
    %2907 = vrot.lane.b32.xlu0 %v2889, 113
    %v2908 = vpop.permute.xlu0 %2907
    %2909 = vrot.lane.b32.xlu0 %v2890, 113
    %v2910 = vpop.permute.xlu0 %2909
    %2911 = vrot.lane.b32.xlu0 %v2891, 113
    %v2912 = vpop.permute.xlu0 %2911
    %2913 = vrot.lane.b32.xlu0 %v2892, 113
    %v2914 = vpop.permute.xlu0 %2913
    %2915 = vrot.lane.b32.xlu0 %v2893, 113
    %v2916 = vpop.permute.xlu0 %2915
    %2917 = vrot.lane.b32.xlu0 %v2894, 113
    %v2918 = vpop.permute.xlu0 %2917
    %2919 = vrot.lane.b32.xlu0 %v2895, 113
    %v2920 = vpop.permute.xlu0 %2919
    %2921 = vrot.lane.b32.xlu0 %v2896, 113
    %v2922 = vpop.permute.xlu0 %2921
    %2923 = vrot.lane.b32.xlu0 %v2897, 113
    %v2924 = vpop.permute.xlu0 %2923
    %2925 = vrot.lane.b32.xlu0 %v2898, 113
    %v2926 = vpop.permute.xlu0 %2925
    %2927 = vrot.lane.b32.xlu0 %v2899, 113
    %v2928 = vpop.permute.xlu0 %2927
    %2929 = vrot.lane.b32.xlu0 %v2900, 113
    %v2930 = vpop.permute.xlu0 %2929
    %2931 = vrot.lane.b32.xlu0 %v2901, 113
    %v2932 = vpop.permute.xlu0 %2931
    %2933 = vrot.lane.b32.xlu0 %v2902, 113
    %v2934 = vpop.permute.xlu0 %2933
    %v2935 = vsel %vm959, %v2904, %v2906
    %v2936 = vsel %vm959, %v2908, %v2910
    %v2937 = vsel %vm959, %v2912, %v2914
    %v2938 = vsel %vm959, %v2916, %v2918
    %v2939 = vsel %vm959, %v2920, %v2922
    %v2940 = vsel %vm959, %v2924, %v2926
    %v2941 = vsel %vm959, %v2928, %v2930
    %v2942 = vsel %vm959, %v2932, %v2934
    %v2951 = vadd.f32 %v2857, %v2935
    %v2952 = vadd.f32 %v2858, %v2936
    %v2953 = vadd.f32 %v2859, %v2937
    %v2954 = vadd.f32 %v2860, %v2938
    %v2955 = vadd.f32 %v2861, %v2939
    %v2956 = vadd.f32 %v2862, %v2940
    %v2957 = vadd.f32 %v2863, %v2941
    %v2958 = vadd.f32 %v2864, %v2942
    %v2967 = vrot.slane %v2952, 7
    %v2968 = vsel %vm2817, %v2967, %v2951
    %v2969 = vrot.slane %v2953, 6
    %v2970 = vsel %vm2820, %v2969, %v2968
    %v2971 = vrot.slane %v2954, 5
    %v2972 = vsel %vm2823, %v2971, %v2970
    %v2973 = vrot.slane %v2955, 4
    %v2974 = vsel %vm2826, %v2973, %v2972
    %v2975 = vrot.slane %v2956, 3
    %v2976 = vsel %vm2829, %v2975, %v2974
    %v2977 = vrot.slane %v2957, 2
    %v2978 = vsel %vm2832, %v2977, %v2976
    %v2979 = vrot.slane %v2958, 1
    %v2980 = vsel %vm2835, %v2979, %v2978
    %2982 = vst [vmem:[#allocation8] sm:$0xff] %v2980
    %v2983 = vlaneseq
    %v2984 = vshrl.u32 %v2983, 7
    %v2985 = vsub.s32 0, %v2984
    %v2986 = vrot.slane %v2857, %v2985
    %v2987 = vlaneseq
    %v2988 = vshrl.u32 %v2987, 7
    %v2989 = vsub.s32 0, %v2988
    %v2990 = vrot.slane %v2858, %v2989
    %v2991 = vlaneseq
    %v2992 = vshrl.u32 %v2991, 7
    %v2993 = vsub.s32 0, %v2992
    %v2994 = vrot.slane %v2859, %v2993
    %v2995 = vlaneseq
    %v2996 = vshrl.u32 %v2995, 7
    %v2997 = vsub.s32 0, %v2996
    %v2998 = vrot.slane %v2860, %v2997
    %v2999 = vlaneseq
    %v3000 = vshrl.u32 %v2999, 7
    %v3001 = vsub.s32 0, %v3000
    %v3002 = vrot.slane %v2861, %v3001
    %v3003 = vlaneseq
    %v3004 = vshrl.u32 %v3003, 7
    %v3005 = vsub.s32 0, %v3004
    %v3006 = vrot.slane %v2862, %v3005
    %v3007 = vlaneseq
    %v3008 = vshrl.u32 %v3007, 7
    %v3009 = vsub.s32 0, %v3008
    %v3010 = vrot.slane %v2863, %v3009
    %v3011 = vlaneseq
    %v3012 = vshrl.u32 %v3011, 7
    %v3013 = vsub.s32 0, %v3012
    %v3014 = vrot.slane %v2864, %v3013
    %v3015 = vmul.f32 %v46, %v2986
    %v3016 = vmul.f32 %v47, %v2990
    %v3017 = vmul.f32 %v48, %v2994
    %v3018 = vmul.f32 %v49, %v2998
    %v3019 = vmul.f32 %v50, %v3002
    %v3020 = vmul.f32 %v51, %v3006
    %v3021 = vmul.f32 %v52, %v3010
    %v3022 = vmul.f32 %v53, %v3014
    %3023 = vadd.xlane.f32.xlu0 %v3015
    %v3024 = vpop.xlane.xlu0 %3023
    %3025 = vadd.xlane.f32.xlu0 %v3016
    %v3026 = vpop.xlane.xlu0 %3025
    %3027 = vadd.xlane.f32.xlu0 %v3017
    %v3028 = vpop.xlane.xlu0 %3027
    %3029 = vadd.xlane.f32.xlu0 %v3018
    %v3030 = vpop.xlane.xlu0 %3029
    %3031 = vadd.xlane.f32.xlu0 %v3019
    %v3032 = vpop.xlane.xlu0 %3031
    %3033 = vadd.xlane.f32.xlu0 %v3020
    %v3034 = vpop.xlane.xlu0 %3033
    %3035 = vadd.xlane.f32.xlu0 %v3021
    %v3036 = vpop.xlane.xlu0 %3035
    %3037 = vadd.xlane.f32.xlu0 %v3022
    %v3038 = vpop.xlane.xlu0 %3037
    %v3047 = vlaneseq
    %v3048 = vand.u32 %v3047, 127
    %v3049 = vlaneseq
    %v3050 = vshrl.u32 %v3049, 7
    %v3051 = vsub.s32 %v3048, %v3050
    %v3052 = vrot.slane %v3024, %v3051
    %v3053 = vlaneseq
    %v3054 = vshrl.u32 %v3053, 7
    %v3055 = vsub.s32 %v3048, %v3054
    %v3056 = vrot.slane %v3026, %v3055
    %v3057 = vlaneseq
    %v3058 = vshrl.u32 %v3057, 7
    %v3059 = vsub.s32 %v3048, %v3058
    %v3060 = vrot.slane %v3028, %v3059
    %v3061 = vlaneseq
    %v3062 = vshrl.u32 %v3061, 7
    %v3063 = vsub.s32 %v3048, %v3062
    %v3064 = vrot.slane %v3030, %v3063
    %v3065 = vlaneseq
    %v3066 = vshrl.u32 %v3065, 7
    %v3067 = vsub.s32 %v3048, %v3066
    %v3068 = vrot.slane %v3032, %v3067
    %v3069 = vlaneseq
    %v3070 = vshrl.u32 %v3069, 7
    %v3071 = vsub.s32 %v3048, %v3070
    %v3072 = vrot.slane %v3034, %v3071
    %v3073 = vlaneseq
    %v3074 = vshrl.u32 %v3073, 7
    %v3075 = vsub.s32 %v3048, %v3074
    %v3076 = vrot.slane %v3036, %v3075
    %v3077 = vlaneseq
    %v3078 = vshrl.u32 %v3077, 7
    %v3079 = vsub.s32 %v3048, %v3078
    %v3080 = vrot.slane %v3038, %v3079
    %v3081 = vsel %vm2817, %v3056, %v3052
    %v3082 = vsel %vm2820, %v3060, %v3081
    %v3083 = vsel %vm2823, %v3064, %v3082
    %v3084 = vsel %vm2826, %v3068, %v3083
    %v3085 = vsel %vm2829, %v3072, %v3084
    %v3086 = vsel %vm2832, %v3076, %v3085
    %v3087 = vsel %vm2835, %v3080, %v3086
    %3089 = vst.msk [vmem:[#allocation5] sm:$0xff] %vm1967, %v3087
    // Predicated region
    $region34: #{tpu_custom_call.1} parent=1 // pred_check
      _
    $region35: #{tpu_custom_call.1} parent=1 // pred_check_branch
      %3091 = sbr.rel (0) target = $region37
    $region36: #{tpu_custom_call.1} parent=1 // pred_region
      %s3093 = ssub.s32 128, 128
      %3094 = vsyncadd [#allocation4], %s3093
      %s3096 = sshll.u32 [#allocation5], 4
      %s3097 = int_to_ptr.vmem [resolvable:$true] %s3096
      %3099 = dma.vmem_to_hbm [thread:$0]  %s3097, 128, %s7, [#allocation4]
    $region37: #{tpu_custom_call.1} parent=1 // pred_fallthru
      _
    // Predicated region
    $region38: #{tpu_custom_call.1} parent=1 // pred_check
      _
    $region39: #{tpu_custom_call.1} parent=1 // pred_check_branch
      %3101 = sbr.rel (0) target = $region41
    $region40: #{tpu_custom_call.1} parent=1 // pred_region
      %s3103 = ssub.s32 128, 128
      %3104 = vsyncadd [#allocation7], %s3103
      %s3106 = sshll.u32 [#allocation6], 4
      %s3107 = int_to_ptr.vmem [resolvable:$true] %s3106
      %3109 = dma.vmem_to_hbm [thread:$0]  %s3107, 128, %s8, [#allocation7]
    $region41: #{tpu_custom_call.1} parent=1 // pred_fallthru
      _
    // Predicated region
    $region42: #{tpu_custom_call.1} parent=1 // pred_check
      _
    $region43: #{tpu_custom_call.1} parent=1 // pred_check_branch
      %3111 = sbr.rel (0) target = $region45
    $region44: #{tpu_custom_call.1} parent=1 // pred_region
      %s3113 = ssub.s32 128, 128
      %3114 = vsyncadd [#allocation7], %s3113
      %s3116 = sshll.u32 [#allocation8], 4
      %s3117 = int_to_ptr.vmem [resolvable:$true] %s3116
      %3119 = dma.vmem_to_hbm [thread:$0]  %s3117, 128, %s9, [#allocation7]
    $region45: #{tpu_custom_call.1} parent=1 // pred_fallthru
      _
    // Predicated region
    $region46: #{tpu_custom_call.1} parent=1 // pred_check
      _
    $region47: #{tpu_custom_call.1} parent=1 // pred_check_branch
      %3121 = sbr.rel (0) target = $region49
    $region48: #{tpu_custom_call.1} parent=1 // pred_region
      %3122 = dma.done [#allocation4], 128
    $region49: #{tpu_custom_call.1} parent=1 // pred_fallthru
      _
    // Predicated region
    $region50: #{tpu_custom_call.1} parent=1 // pred_check
      _
    $region51: #{tpu_custom_call.1} parent=1 // pred_check_branch
      %3124 = sbr.rel (0) target = $region53
    $region52: #{tpu_custom_call.1} parent=1 // pred_region
      %3125 = dma.done [#allocation7], 128
    $region53: #{tpu_custom_call.1} parent=1 // pred_fallthru
      _
    // Predicated region
    $region54: #{tpu_custom_call.1} parent=1 // pred_check
      _
    $region55: #{tpu_custom_call.1} parent=1 // pred_check_branch
      %3127 = sbr.rel (0) target = $region57
    $region56: #{tpu_custom_call.1} parent=1 // pred_region
      %3128 = dma.done [#allocation7], 128
    $region57: #{tpu_custom_call.1} parent=1 // pred_fallthru
      _
    %3129 = vsyncpa [#allocation3], 1
    %3130 = vsyncpa [#allocation4], 1
    %3131 = vsyncpa [#allocation7], 1

</llo_original>
